<compile_context>
chip_gen: v7x
topology: tpu7x:2x2x1
jax: 0.10.0
libtpu: 0.0.40
codegen_flags: <defaults>
</compile_context>

<pallas_src>
import math

import jax
import jax.numpy as jnp
import numpy as np
from jax.experimental import pallas as pl
from jax.experimental.pallas import tpu as pltpu


# ----------------------------- config (SiglipVisionConfig-like, small) --------------
BATCH = 2
SEQ = 16            # num image patches
HIDDEN = 128        # embed_dim (lane-dense: multiple of 128)
NUM_HEADS = 4
HEAD_DIM = HIDDEN // NUM_HEADS
INTERMEDIATE = 256  # MLP intermediate size (lane-dense)
LN_EPS = 1e-6

MXU_DTYPE = jnp.bfloat16   # matmul operand dtype (accumulation stays f32)


def _gelu_tanh(x):
    # gelu_pytorch_tanh
    c = math.sqrt(2.0 / math.pi)
    return 0.5 * x * (1.0 + jnp.tanh(c * (x + 0.044715 * x * x * x)))


def _layernorm(x, g, b, eps):
    # PyTorch LayerNorm: biased variance over last dim
    mean = jnp.mean(x, axis=-1, keepdims=True)
    var = jnp.mean((x - mean) ** 2, axis=-1, keepdims=True)
    return (x - mean) * jax.lax.rsqrt(var + eps) * g + b


# ----------------------------- Pallas kernel -----------------------------------------
def encoder_layer_kernel(
    x_ref,                       # (B*S, D)   f32
    ln1_g_ref, ln1_b_ref,        # (1, D)     f32
    wqkv_ref, bqkv_ref,          # (D, 3D) bf16, (1, 3D) f32
    wo_ref, bo_ref,              # (D, D)  bf16, (1, D)  f32
    ln2_g_ref, ln2_b_ref,        # (1, D)     f32
    w1_ref, b1_ref,              # (D, I)  bf16, (1, I)  f32
    w2_ref, b2_ref,              # (I, D)  bf16, (1, D)  f32
    y_ref,                       # (B*S, D)   f32
):
    x = x_ref[...]                                                    # (BS, D) f32

    # -------- LayerNorm 1 (f32) --------
    h = _layernorm(x, ln1_g_ref[...], ln1_b_ref[...], LN_EPS)

    # -------- fused Q/K/V projection: single (BS, D) @ (D, 3D) matmul --------
    qkv = (jnp.dot(h.astype(MXU_DTYPE), wqkv_ref[...],
                   preferred_element_type=jnp.float32)
           + bqkv_ref[...])                                           # (BS, 3D) f32

    # batch-major view for attention (leading-dim split; minor dim unchanged)
    qkv = qkv.reshape(BATCH, SEQ, 3 * HIDDEN)
    # D = 128 -> these lane slices are tile-aligned (no copies).
    q = qkv[:, :, 0:HIDDEN] * (HEAD_DIM ** -0.5)
    k = qkv[:, :, HIDDEN:2 * HIDDEN]
    v = qkv[:, :, 2 * HIDDEN:3 * HIDDEN]

    # -------- self-attention: per-head loop, batched over B, no transposes --------
    ctx_heads = []
    for hd in range(NUM_HEADS):
        lo = hd * HEAD_DIM
        hi = lo + HEAD_DIM
        qh = q[:, :, lo:hi].astype(MXU_DTYPE)                         # (B, S, Dh)
        kh = k[:, :, lo:hi].astype(MXU_DTYPE)                         # (B, S, Dh)
        vh = v[:, :, lo:hi].astype(MXU_DTYPE)                         # (B, S, Dh)
        s = jnp.einsum("bqd,bkd->bqk", qh, kh,
                       preferred_element_type=jnp.float32)            # (B, S, S) f32
        s = s - jnp.max(s, axis=-1, keepdims=True)
        p = jnp.exp(s)
        p = p * pl.reciprocal(jnp.sum(p, axis=-1, keepdims=True), approx=True)
        ctx_heads.append(
            jnp.einsum("bqk,bkd->bqd", p.astype(MXU_DTYPE), vh,
                       preferred_element_type=jnp.float32))           # (B, S, Dh) f32

    ctx = jnp.concatenate(ctx_heads, axis=-1)                         # (B, S, D)
    ctx = ctx.reshape(BATCH * SEQ, HIDDEN)                            # (BS, D)

    attn_out = (jnp.dot(ctx.astype(MXU_DTYPE), wo_ref[...],
                        preferred_element_type=jnp.float32) + bo_ref[...])

    # residual 1
    h1 = x + attn_out

    # -------- LayerNorm 2 + MLP (gelu_pytorch_tanh) --------
    h2 = _layernorm(h1, ln2_g_ref[...], ln2_b_ref[...], LN_EPS)
    m = (jnp.dot(h2.astype(MXU_DTYPE), w1_ref[...],
                 preferred_element_type=jnp.float32) + b1_ref[...])
    m = _gelu_tanh(m)
    m = (jnp.dot(m.astype(MXU_DTYPE), w2_ref[...],
                 preferred_element_type=jnp.float32) + b2_ref[...])

    # residual 2
    y_ref[...] = (h1 + m).astype(y_ref.dtype)


# ----------------------------- wrapper -------------------------------------------------
def siglip_encoder_layer(x, params):
    B, S, D = x.shape

    # Fuse q/k/v into one matmul; pre-cast matmul weights to bf16 (halves weight bytes,
    # hits the fast MXU path).  Biases / LN params stay f32.
    wqkv = jnp.concatenate([params["wq"], params["wk"], params["wv"]], axis=1)
    bqkv = jnp.concatenate([params["bq"], params["bk"], params["bv"]], axis=1)

    flat_args = (
        x.reshape(B * S, D),                          # collapse batch into matmul M dim
        params["ln1_g"], params["ln1_b"],
        wqkv.astype(MXU_DTYPE), bqkv,
        params["wo"].astype(MXU_DTYPE), params["bo"],
        params["ln2_g"], params["ln2_b"],
        params["w1"].astype(MXU_DTYPE), params["b1"],
        params["w2"].astype(MXU_DTYPE), params["b2"],
    )

    # Single step: every operand is a whole-array VMEM block (<1 MiB total here), so no
    # grid / pipelining machinery and no per-step overhead.
    vmem_spec = pl.BlockSpec(memory_space=pltpu.MemorySpace.VMEM)
    out = pl.pallas_call(
        encoder_layer_kernel,
        out_shape=jax.ShapeDtypeStruct((B * S, D), x.dtype),
        in_specs=[vmem_spec] * len(flat_args),
        out_specs=vmem_spec,
    )(*flat_args)
    return out.reshape(B, S, D)


# ----------------------------- pure-JAX reference (f32) --------------------------------
def reference_encoder_layer(x, p):
    h = _layernorm(x, p["ln1_g"], p["ln1_b"], LN_EPS)
    B, S, D = x.shape
    q = h @ p["wq"] + p["bq"]
    k = h @ p["wk"] + p["bk"]
    v = h @ p["wv"] + p["bv"]
    q = q.reshape(B, S, NUM_HEADS, HEAD_DIM).transpose(0, 2, 1, 3)
    k = k.reshape(B, S, NUM_HEADS, HEAD_DIM).transpose(0, 2, 1, 3)
    v = v.reshape(B, S, NUM_HEADS, HEAD_DIM).transpose(0, 2, 1, 3)
    scores = jnp.einsum("bhqd,bhkd->bhqk", q, k) * (HEAD_DIM ** -0.5)
    attn = jax.nn.softmax(scores, axis=-1)
    ctx = jnp.einsum("bhqk,bhkd->bhqd", attn, v)
    ctx = ctx.transpose(0, 2, 1, 3).reshape(B, S, D)
    attn_out = ctx @ p["wo"] + p["bo"]
    h1 = x + attn_out
    h2 = _layernorm(h1, p["ln2_g"], p["ln2_b"], LN_EPS)
    m = _gelu_tanh(h2 @ p["w1"] + p["b1"])
    m = m @ p["w2"] + p["b2"]
    return h1 + m


# ----------------------------- params / main -------------------------------------------
def make_params(key):
    ks = jax.random.split(key, 12)
    D, I = HIDDEN, INTERMEDIATE
    scale = 0.02

    def lin(k, fan_in, fan_out):
        return jax.random.normal(k, (fan_in, fan_out), jnp.float32) * scale

    return {
        "ln1_g": jnp.ones((1, D), jnp.float32),
        "ln1_b": jnp.zeros((1, D), jnp.float32),
        "wq": lin(ks[0], D, D), "bq": jax.random.normal(ks[1], (1, D), jnp.float32) * scale,
        "wk": lin(ks[2], D, D), "bk": jax.random.normal(ks[3], (1, D), jnp.float32) * scale,
        "wv": lin(ks[4], D, D), "bv": jax.random.normal(ks[5], (1, D), jnp.float32) * scale,
        "wo": lin(ks[6], D, D), "bo": jax.random.normal(ks[7], (1, D), jnp.float32) * scale,
        "ln2_g": jnp.ones((1, D), jnp.float32),
        "ln2_b": jnp.zeros((1, D), jnp.float32),
        "w1": lin(ks[8], D, I), "b1": jax.random.normal(ks[9], (1, I), jnp.float32) * scale,
        "w2": lin(ks[10], I, D), "b2": jax.random.normal(ks[11], (1, D), jnp.float32) * scale,
    }


if __name__ == "__main__":
    key = jax.random.PRNGKey(0)
    k_x, k_p = jax.random.split(key)
    x = jax.random.normal(k_x, (BATCH, SEQ, HIDDEN), jnp.float32)
    params = make_params(k_p)

    out = siglip_encoder_layer(x, params)
    out = jax.block_until_ready(out)

    ref = reference_encoder_layer(x, params)
    # bf16 MXU operands (f32 accumulation) -> loosened tolerance vs. pure-f32 reference.
    np.testing.assert_allclose(np.asarray(out), np.asarray(ref), rtol=2e-2, atol=2e-2)

    print("KERNEL_OK")
</pallas_src>

<mosaic_0001>
module attributes {stable_mosaic.version = 11 : i64} {
  func.func @encoder_layer_kernel(%arg0: memref<32x128xf32, #tpu.memory_space<vmem>>, %arg1: memref<1x128xf32, #tpu.memory_space<vmem>>, %arg2: memref<1x128xf32, #tpu.memory_space<vmem>>, %arg3: memref<128x384xbf16, #tpu.memory_space<vmem>>, %arg4: memref<1x384xf32, #tpu.memory_space<vmem>>, %arg5: memref<128x128xbf16, #tpu.memory_space<vmem>>, %arg6: memref<1x128xf32, #tpu.memory_space<vmem>>, %arg7: memref<1x128xf32, #tpu.memory_space<vmem>>, %arg8: memref<1x128xf32, #tpu.memory_space<vmem>>, %arg9: memref<128x256xbf16, #tpu.memory_space<vmem>>, %arg10: memref<1x256xf32, #tpu.memory_space<vmem>>, %arg11: memref<256x128xbf16, #tpu.memory_space<vmem>>, %arg12: memref<1x128xf32, #tpu.memory_space<vmem>>, %arg13: memref<32x128xf32, #tpu.memory_space<vmem>>) attributes {dimension_semantics = [], scalar_prefetch = 0 : i64, scratch_operands = 0 : i64, tpu.core_type = #tpu.core_type<tc>} {
    %c0 = arith.constant 0 : index
    %c0_0 = arith.constant 0 : index
    %0 = vector.load %arg0[%c0, %c0_0] : memref<32x128xf32, #tpu.memory_space<vmem>>, vector<32x128xf32>
    %c0_1 = arith.constant 0 : index
    %c0_2 = arith.constant 0 : index
    %1 = vector.load %arg1[%c0_1, %c0_2] : memref<1x128xf32, #tpu.memory_space<vmem>>, vector<1x128xf32>
    %c0_3 = arith.constant 0 : index
    %c0_4 = arith.constant 0 : index
    %2 = vector.load %arg2[%c0_3, %c0_4] : memref<1x128xf32, #tpu.memory_space<vmem>>, vector<1x128xf32>
    %cst = arith.constant dense<0.000000e+00> : vector<32xf32>
    %3 = vector.multi_reduction <add>, %0, %cst [1] : vector<32x128xf32> to vector<32xf32>
    %4 = vector.shape_cast %3 : vector<32xf32> to vector<32x1xf32>
    %cst_5 = arith.constant 1.280000e+02 : f32
    %5 = vector.broadcast %cst_5 : f32 to vector<32x1xf32>
    %6 = arith.divf %4, %5 : vector<32x1xf32>
    %7 = vector.broadcast %6 : vector<32x1xf32> to vector<32x128xf32>
    %8 = arith.subf %0, %7 : vector<32x128xf32>
    %9 = arith.mulf %8, %8 : vector<32x128xf32>
    %cst_6 = arith.constant dense<0.000000e+00> : vector<32xf32>
    %10 = vector.multi_reduction <add>, %9, %cst_6 [1] : vector<32x128xf32> to vector<32xf32>
    %11 = vector.shape_cast %10 : vector<32xf32> to vector<32x1xf32>
    %cst_7 = arith.constant 1.280000e+02 : f32
    %12 = vector.broadcast %cst_7 : f32 to vector<32x1xf32>
    %13 = arith.divf %11, %12 : vector<32x1xf32>
    %14 = vector.broadcast %6 : vector<32x1xf32> to vector<32x128xf32>
    %15 = arith.subf %0, %14 : vector<32x128xf32>
    %cst_8 = arith.constant 9.99999997E-7 : f32
    %16 = vector.broadcast %cst_8 : f32 to vector<32x1xf32>
    %17 = arith.addf %13, %16 : vector<32x1xf32>
    %18 = math.rsqrt %17 : vector<32x1xf32>
    %19 = vector.broadcast %18 : vector<32x1xf32> to vector<32x128xf32>
    %20 = arith.mulf %15, %19 : vector<32x128xf32>
    %21 = vector.broadcast %1 : vector<1x128xf32> to vector<32x128xf32>
    %22 = arith.mulf %20, %21 : vector<32x128xf32>
    %23 = vector.broadcast %2 : vector<1x128xf32> to vector<32x128xf32>
    %24 = arith.addf %22, %23 : vector<32x128xf32>
    %25 = arith.truncf %24 : vector<32x128xf32> to vector<32x128xbf16>
    %c0_9 = arith.constant 0 : index
    %c0_10 = arith.constant 0 : index
    %26 = vector.load %arg3[%c0_9, %c0_10] : memref<128x384xbf16, #tpu.memory_space<vmem>>, vector<128x384xbf16>
    %cst_11 = arith.constant dense<0.000000e+00> : vector<32x384xf32>
    %27 = tpu.matmul %25, %26, %cst_11 {dimension_numbers = #tpu.dot_dimension_numbers<[1], [0], [0], [1], [0, 0, 1, 1], [], []>} : vector<32x128xbf16>, vector<128x384xbf16>, vector<32x384xf32> -> vector<32x384xf32>
    %c0_12 = arith.constant 0 : index
    %c0_13 = arith.constant 0 : index
    %28 = vector.load %arg4[%c0_12, %c0_13] : memref<1x384xf32, #tpu.memory_space<vmem>>, vector<1x384xf32>
    %29 = vector.broadcast %28 : vector<1x384xf32> to vector<32x384xf32>
    %30 = arith.addf %27, %29 : vector<32x384xf32>
    %31 = vector.shape_cast %30 : vector<32x384xf32> to vector<2x16x384xf32>
    %32 = vector.extract_strided_slice %31 {offsets = [0, 0, 0], sizes = [2, 16, 128], strides = [1, 1, 1]} : vector<2x16x384xf32> to vector<2x16x128xf32>
    %cst_14 = arith.constant 0.176776692 : f32
    %33 = vector.broadcast %cst_14 : f32 to vector<2x16x128xf32>
    %34 = arith.mulf %32, %33 : vector<2x16x128xf32>
    %35 = vector.extract_strided_slice %31 {offsets = [0, 0, 128], sizes = [2, 16, 128], strides = [1, 1, 1]} : vector<2x16x384xf32> to vector<2x16x128xf32>
    %36 = vector.extract_strided_slice %31 {offsets = [0, 0, 256], sizes = [2, 16, 128], strides = [1, 1, 1]} : vector<2x16x384xf32> to vector<2x16x128xf32>
    %37 = vector.extract_strided_slice %34 {offsets = [0, 0, 0], sizes = [2, 16, 32], strides = [1, 1, 1]} : vector<2x16x128xf32> to vector<2x16x32xf32>
    %38 = arith.truncf %37 : vector<2x16x32xf32> to vector<2x16x32xbf16>
    %39 = vector.extract_strided_slice %35 {offsets = [0, 0, 0], sizes = [2, 16, 32], strides = [1, 1, 1]} : vector<2x16x128xf32> to vector<2x16x32xf32>
    %40 = arith.truncf %39 : vector<2x16x32xf32> to vector<2x16x32xbf16>
    %41 = vector.extract_strided_slice %36 {offsets = [0, 0, 0], sizes = [2, 16, 32], strides = [1, 1, 1]} : vector<2x16x128xf32> to vector<2x16x32xf32>
    %42 = arith.truncf %41 : vector<2x16x32xf32> to vector<2x16x32xbf16>
    "tpu.trace_start"() <{level = 10 : i32, message = "bqd,bkd->bqk"}> : () -> ()
    %cst_15 = arith.constant dense<0.000000e+00> : vector<2x16x16xf32>
    %43 = tpu.matmul %38, %40, %cst_15 {dimension_numbers = #tpu.dot_dimension_numbers<[2], [2], [1], [1], [0, 0, 0, 1, 1, 1], [0], [0]>} : vector<2x16x32xbf16>, vector<2x16x32xbf16>, vector<2x16x16xf32> -> vector<2x16x16xf32>
    "tpu.trace_stop"() : () -> ()
    %cst_16 = arith.constant dense<0xFF800000> : vector<2x16xf32>
    %44 = vector.multi_reduction <maximumf>, %43, %cst_16 [2] : vector<2x16x16xf32> to vector<2x16xf32>
    %45 = vector.shape_cast %44 : vector<2x16xf32> to vector<2x16x1xf32>
    %46 = vector.broadcast %45 : vector<2x16x1xf32> to vector<2x16x16xf32>
    %47 = arith.subf %43, %46 : vector<2x16x16xf32>
    %48 = math.exp %47 : vector<2x16x16xf32>
    %cst_17 = arith.constant dense<0.000000e+00> : vector<2x16xf32>
    %49 = vector.multi_reduction <add>, %48, %cst_17 [2] : vector<2x16x16xf32> to vector<2x16xf32>
    %50 = vector.shape_cast %49 : vector<2x16xf32> to vector<2x16x1xf32>
    %51 = tpu.reciprocal %50 {approx = true} : vector<2x16x1xf32> -> vector<2x16x1xf32>
    %52 = vector.broadcast %51 : vector<2x16x1xf32> to vector<2x16x16xf32>
    %53 = arith.mulf %48, %52 : vector<2x16x16xf32>
    %54 = arith.truncf %53 : vector<2x16x16xf32> to vector<2x16x16xbf16>
    "tpu.trace_start"() <{level = 10 : i32, message = "bqk,bkd->bqd"}> : () -> ()
    %cst_18 = arith.constant dense<0.000000e+00> : vector<2x16x32xf32>
    %55 = tpu.matmul %54, %42, %cst_18 {dimension_numbers = #tpu.dot_dimension_numbers<[2], [1], [1], [2], [0, 0, 0, 1, 1, 2], [0], [0]>} : vector<2x16x16xbf16>, vector<2x16x32xbf16>, vector<2x16x32xf32> -> vector<2x16x32xf32>
    "tpu.trace_stop"() : () -> ()
    %56 = vector.extract_strided_slice %34 {offsets = [0, 0, 32], sizes = [2, 16, 32], strides = [1, 1, 1]} : vector<2x16x128xf32> to vector<2x16x32xf32>
    %57 = arith.truncf %56 : vector<2x16x32xf32> to vector<2x16x32xbf16>
    %58 = vector.extract_strided_slice %35 {offsets = [0, 0, 32], sizes = [2, 16, 32], strides = [1, 1, 1]} : vector<2x16x128xf32> to vector<2x16x32xf32>
    %59 = arith.truncf %58 : vector<2x16x32xf32> to vector<2x16x32xbf16>
    %60 = vector.extract_strided_slice %36 {offsets = [0, 0, 32], sizes = [2, 16, 32], strides = [1, 1, 1]} : vector<2x16x128xf32> to vector<2x16x32xf32>
    %61 = arith.truncf %60 : vector<2x16x32xf32> to vector<2x16x32xbf16>
    "tpu.trace_start"() <{level = 10 : i32, message = "bqd,bkd->bqk"}> : () -> ()
    %cst_19 = arith.constant dense<0.000000e+00> : vector<2x16x16xf32>
    %62 = tpu.matmul %57, %59, %cst_19 {dimension_numbers = #tpu.dot_dimension_numbers<[2], [2], [1], [1], [0, 0, 0, 1, 1, 1], [0], [0]>} : vector<2x16x32xbf16>, vector<2x16x32xbf16>, vector<2x16x16xf32> -> vector<2x16x16xf32>
    "tpu.trace_stop"() : () -> ()
    %cst_20 = arith.constant dense<0xFF800000> : vector<2x16xf32>
    %63 = vector.multi_reduction <maximumf>, %62, %cst_20 [2] : vector<2x16x16xf32> to vector<2x16xf32>
    %64 = vector.shape_cast %63 : vector<2x16xf32> to vector<2x16x1xf32>
    %65 = vector.broadcast %64 : vector<2x16x1xf32> to vector<2x16x16xf32>
    %66 = arith.subf %62, %65 : vector<2x16x16xf32>
    %67 = math.exp %66 : vector<2x16x16xf32>
    %cst_21 = arith.constant dense<0.000000e+00> : vector<2x16xf32>
    %68 = vector.multi_reduction <add>, %67, %cst_21 [2] : vector<2x16x16xf32> to vector<2x16xf32>
    %69 = vector.shape_cast %68 : vector<2x16xf32> to vector<2x16x1xf32>
    %70 = tpu.reciprocal %69 {approx = true} : vector<2x16x1xf32> -> vector<2x16x1xf32>
    %71 = vector.broadcast %70 : vector<2x16x1xf32> to vector<2x16x16xf32>
    %72 = arith.mulf %67, %71 : vector<2x16x16xf32>
    %73 = arith.truncf %72 : vector<2x16x16xf32> to vector<2x16x16xbf16>
    "tpu.trace_start"() <{level = 10 : i32, message = "bqk,bkd->bqd"}> : () -> ()
    %cst_22 = arith.constant dense<0.000000e+00> : vector<2x16x32xf32>
    %74 = tpu.matmul %73, %61, %cst_22 {dimension_numbers = #tpu.dot_dimension_numbers<[2], [1], [1], [2], [0, 0, 0, 1, 1, 2], [0], [0]>} : vector<2x16x16xbf16>, vector<2x16x32xbf16>, vector<2x16x32xf32> -> vector<2x16x32xf32>
    "tpu.trace_stop"() : () -> ()
    %75 = vector.extract_strided_slice %34 {offsets = [0, 0, 64], sizes = [2, 16, 32], strides = [1, 1, 1]} : vector<2x16x128xf32> to vector<2x16x32xf32>
    %76 = arith.truncf %75 : vector<2x16x32xf32> to vector<2x16x32xbf16>
    %77 = vector.extract_strided_slice %35 {offsets = [0, 0, 64], sizes = [2, 16, 32], strides = [1, 1, 1]} : vector<2x16x128xf32> to vector<2x16x32xf32>
    %78 = arith.truncf %77 : vector<2x16x32xf32> to vector<2x16x32xbf16>
    %79 = vector.extract_strided_slice %36 {offsets = [0, 0, 64], sizes = [2, 16, 32], strides = [1, 1, 1]} : vector<2x16x128xf32> to vector<2x16x32xf32>
    %80 = arith.truncf %79 : vector<2x16x32xf32> to vector<2x16x32xbf16>
    "tpu.trace_start"() <{level = 10 : i32, message = "bqd,bkd->bqk"}> : () -> ()
    %cst_23 = arith.constant dense<0.000000e+00> : vector<2x16x16xf32>
    %81 = tpu.matmul %76, %78, %cst_23 {dimension_numbers = #tpu.dot_dimension_numbers<[2], [2], [1], [1], [0, 0, 0, 1, 1, 1], [0], [0]>} : vector<2x16x32xbf16>, vector<2x16x32xbf16>, vector<2x16x16xf32> -> vector<2x16x16xf32>
    "tpu.trace_stop"() : () -> ()
    %cst_24 = arith.constant dense<0xFF800000> : vector<2x16xf32>
    %82 = vector.multi_reduction <maximumf>, %81, %cst_24 [2] : vector<2x16x16xf32> to vector<2x16xf32>
    %83 = vector.shape_cast %82 : vector<2x16xf32> to vector<2x16x1xf32>
    %84 = vector.broadcast %83 : vector<2x16x1xf32> to vector<2x16x16xf32>
    %85 = arith.subf %81, %84 : vector<2x16x16xf32>
    %86 = math.exp %85 : vector<2x16x16xf32>
    %cst_25 = arith.constant dense<0.000000e+00> : vector<2x16xf32>
    %87 = vector.multi_reduction <add>, %86, %cst_25 [2] : vector<2x16x16xf32> to vector<2x16xf32>
    %88 = vector.shape_cast %87 : vector<2x16xf32> to vector<2x16x1xf32>
    %89 = tpu.reciprocal %88 {approx = true} : vector<2x16x1xf32> -> vector<2x16x1xf32>
    %90 = vector.broadcast %89 : vector<2x16x1xf32> to vector<2x16x16xf32>
    %91 = arith.mulf %86, %90 : vector<2x16x16xf32>
    %92 = arith.truncf %91 : vector<2x16x16xf32> to vector<2x16x16xbf16>
    "tpu.trace_start"() <{level = 10 : i32, message = "bqk,bkd->bqd"}> : () -> ()
    %cst_26 = arith.constant dense<0.000000e+00> : vector<2x16x32xf32>
    %93 = tpu.matmul %92, %80, %cst_26 {dimension_numbers = #tpu.dot_dimension_numbers<[2], [1], [1], [2], [0, 0, 0, 1, 1, 2], [0], [0]>} : vector<2x16x16xbf16>, vector<2x16x32xbf16>, vector<2x16x32xf32> -> vector<2x16x32xf32>
    "tpu.trace_stop"() : () -> ()
    %94 = vector.extract_strided_slice %34 {offsets = [0, 0, 96], sizes = [2, 16, 32], strides = [1, 1, 1]} : vector<2x16x128xf32> to vector<2x16x32xf32>
    %95 = arith.truncf %94 : vector<2x16x32xf32> to vector<2x16x32xbf16>
    %96 = vector.extract_strided_slice %35 {offsets = [0, 0, 96], sizes = [2, 16, 32], strides = [1, 1, 1]} : vector<2x16x128xf32> to vector<2x16x32xf32>
    %97 = arith.truncf %96 : vector<2x16x32xf32> to vector<2x16x32xbf16>
    %98 = vector.extract_strided_slice %36 {offsets = [0, 0, 96], sizes = [2, 16, 32], strides = [1, 1, 1]} : vector<2x16x128xf32> to vector<2x16x32xf32>
    %99 = arith.truncf %98 : vector<2x16x32xf32> to vector<2x16x32xbf16>
    "tpu.trace_start"() <{level = 10 : i32, message = "bqd,bkd->bqk"}> : () -> ()
    %cst_27 = arith.constant dense<0.000000e+00> : vector<2x16x16xf32>
    %100 = tpu.matmul %95, %97, %cst_27 {dimension_numbers = #tpu.dot_dimension_numbers<[2], [2], [1], [1], [0, 0, 0, 1, 1, 1], [0], [0]>} : vector<2x16x32xbf16>, vector<2x16x32xbf16>, vector<2x16x16xf32> -> vector<2x16x16xf32>
    "tpu.trace_stop"() : () -> ()
    %cst_28 = arith.constant dense<0xFF800000> : vector<2x16xf32>
    %101 = vector.multi_reduction <maximumf>, %100, %cst_28 [2] : vector<2x16x16xf32> to vector<2x16xf32>
    %102 = vector.shape_cast %101 : vector<2x16xf32> to vector<2x16x1xf32>
    %103 = vector.broadcast %102 : vector<2x16x1xf32> to vector<2x16x16xf32>
    %104 = arith.subf %100, %103 : vector<2x16x16xf32>
    %105 = math.exp %104 : vector<2x16x16xf32>
    %cst_29 = arith.constant dense<0.000000e+00> : vector<2x16xf32>
    %106 = vector.multi_reduction <add>, %105, %cst_29 [2] : vector<2x16x16xf32> to vector<2x16xf32>
    %107 = vector.shape_cast %106 : vector<2x16xf32> to vector<2x16x1xf32>
    %108 = tpu.reciprocal %107 {approx = true} : vector<2x16x1xf32> -> vector<2x16x1xf32>
    %109 = vector.broadcast %108 : vector<2x16x1xf32> to vector<2x16x16xf32>
    %110 = arith.mulf %105, %109 : vector<2x16x16xf32>
    %111 = arith.truncf %110 : vector<2x16x16xf32> to vector<2x16x16xbf16>
    "tpu.trace_start"() <{level = 10 : i32, message = "bqk,bkd->bqd"}> : () -> ()
    %cst_30 = arith.constant dense<0.000000e+00> : vector<2x16x32xf32>
    %112 = tpu.matmul %111, %99, %cst_30 {dimension_numbers = #tpu.dot_dimension_numbers<[2], [1], [1], [2], [0, 0, 0, 1, 1, 2], [0], [0]>} : vector<2x16x16xbf16>, vector<2x16x32xbf16>, vector<2x16x32xf32> -> vector<2x16x32xf32>
    "tpu.trace_stop"() : () -> ()
    %113 = tpu.concatenate %55, %74, %93, %112 in 2 : vector<2x16x32xf32>, vector<2x16x32xf32>, vector<2x16x32xf32>, vector<2x16x32xf32> -> vector<2x16x128xf32>
    %114 = vector.shape_cast %113 : vector<2x16x128xf32> to vector<32x128xf32>
    %115 = arith.truncf %114 : vector<32x128xf32> to vector<32x128xbf16>
    %c0_31 = arith.constant 0 : index
    %c0_32 = arith.constant 0 : index
    %116 = vector.load %arg5[%c0_31, %c0_32] : memref<128x128xbf16, #tpu.memory_space<vmem>>, vector<128x128xbf16>
    %cst_33 = arith.constant dense<0.000000e+00> : vector<32x128xf32>
    %117 = tpu.matmul %115, %116, %cst_33 {dimension_numbers = #tpu.dot_dimension_numbers<[1], [0], [0], [1], [0, 0, 1, 1], [], []>} : vector<32x128xbf16>, vector<128x128xbf16>, vector<32x128xf32> -> vector<32x128xf32>
    %c0_34 = arith.constant 0 : index
    %c0_35 = arith.constant 0 : index
    %118 = vector.load %arg6[%c0_34, %c0_35] : memref<1x128xf32, #tpu.memory_space<vmem>>, vector<1x128xf32>
    %119 = vector.broadcast %118 : vector<1x128xf32> to vector<32x128xf32>
    %120 = arith.addf %117, %119 : vector<32x128xf32>
    %121 = arith.addf %0, %120 : vector<32x128xf32>
    %c0_36 = arith.constant 0 : index
    %c0_37 = arith.constant 0 : index
    %122 = vector.load %arg7[%c0_36, %c0_37] : memref<1x128xf32, #tpu.memory_space<vmem>>, vector<1x128xf32>
    %c0_38 = arith.constant 0 : index
    %c0_39 = arith.constant 0 : index
    %123 = vector.load %arg8[%c0_38, %c0_39] : memref<1x128xf32, #tpu.memory_space<vmem>>, vector<1x128xf32>
    %cst_40 = arith.constant dense<0.000000e+00> : vector<32xf32>
    %124 = vector.multi_reduction <add>, %121, %cst_40 [1] : vector<32x128xf32> to vector<32xf32>
    %125 = vector.shape_cast %124 : vector<32xf32> to vector<32x1xf32>
    %cst_41 = arith.constant 1.280000e+02 : f32
    %126 = vector.broadcast %cst_41 : f32 to vector<32x1xf32>
    %127 = arith.divf %125, %126 : vector<32x1xf32>
    %128 = vector.broadcast %127 : vector<32x1xf32> to vector<32x128xf32>
    %129 = arith.subf %121, %128 : vector<32x128xf32>
    %130 = arith.mulf %129, %129 : vector<32x128xf32>
    %cst_42 = arith.constant dense<0.000000e+00> : vector<32xf32>
    %131 = vector.multi_reduction <add>, %130, %cst_42 [1] : vector<32x128xf32> to vector<32xf32>
    %132 = vector.shape_cast %131 : vector<32xf32> to vector<32x1xf32>
    %cst_43 = arith.constant 1.280000e+02 : f32
    %133 = vector.broadcast %cst_43 : f32 to vector<32x1xf32>
    %134 = arith.divf %132, %133 : vector<32x1xf32>
    %135 = vector.broadcast %127 : vector<32x1xf32> to vector<32x128xf32>
    %136 = arith.subf %121, %135 : vector<32x128xf32>
    %cst_44 = arith.constant 9.99999997E-7 : f32
    %137 = vector.broadcast %cst_44 : f32 to vector<32x1xf32>
    %138 = arith.addf %134, %137 : vector<32x1xf32>
    %139 = math.rsqrt %138 : vector<32x1xf32>
    %140 = vector.broadcast %139 : vector<32x1xf32> to vector<32x128xf32>
    %141 = arith.mulf %136, %140 : vector<32x128xf32>
    %142 = vector.broadcast %122 : vector<1x128xf32> to vector<32x128xf32>
    %143 = arith.mulf %141, %142 : vector<32x128xf32>
    %144 = vector.broadcast %123 : vector<1x128xf32> to vector<32x128xf32>
    %145 = arith.addf %143, %144 : vector<32x128xf32>
    %146 = arith.truncf %145 : vector<32x128xf32> to vector<32x128xbf16>
    %c0_45 = arith.constant 0 : index
    %c0_46 = arith.constant 0 : index
    %147 = vector.load %arg9[%c0_45, %c0_46] : memref<128x256xbf16, #tpu.memory_space<vmem>>, vector<128x256xbf16>
    %cst_47 = arith.constant dense<0.000000e+00> : vector<32x256xf32>
    %148 = tpu.matmul %146, %147, %cst_47 {dimension_numbers = #tpu.dot_dimension_numbers<[1], [0], [0], [1], [0, 0, 1, 1], [], []>} : vector<32x128xbf16>, vector<128x256xbf16>, vector<32x256xf32> -> vector<32x256xf32>
    %c0_48 = arith.constant 0 : index
    %c0_49 = arith.constant 0 : index
    %149 = vector.load %arg10[%c0_48, %c0_49] : memref<1x256xf32, #tpu.memory_space<vmem>>, vector<1x256xf32>
    %150 = vector.broadcast %149 : vector<1x256xf32> to vector<32x256xf32>
    %151 = arith.addf %148, %150 : vector<32x256xf32>
    %cst_50 = arith.constant 5.000000e-01 : f32
    %152 = vector.broadcast %cst_50 : f32 to vector<32x256xf32>
    %153 = arith.mulf %152, %151 : vector<32x256xf32>
    %cst_51 = arith.constant 4.471500e-02 : f32
    %154 = vector.broadcast %cst_51 : f32 to vector<32x256xf32>
    %155 = arith.mulf %154, %151 : vector<32x256xf32>
    %156 = arith.mulf %155, %151 : vector<32x256xf32>
    %157 = arith.mulf %156, %151 : vector<32x256xf32>
    %158 = arith.addf %151, %157 : vector<32x256xf32>
    %cst_52 = arith.constant 0.797884583 : f32
    %159 = vector.broadcast %cst_52 : f32 to vector<32x256xf32>
    %160 = arith.mulf %159, %158 : vector<32x256xf32>
    %161 = math.tanh %160 : vector<32x256xf32>
    %cst_53 = arith.constant 1.000000e+00 : f32
    %162 = vector.broadcast %cst_53 : f32 to vector<32x256xf32>
    %163 = arith.addf %162, %161 : vector<32x256xf32>
    %164 = arith.mulf %153, %163 : vector<32x256xf32>
    %165 = arith.truncf %164 : vector<32x256xf32> to vector<32x256xbf16>
    %c0_54 = arith.constant 0 : index
    %c0_55 = arith.constant 0 : index
    %166 = vector.load %arg11[%c0_54, %c0_55] : memref<256x128xbf16, #tpu.memory_space<vmem>>, vector<256x128xbf16>
    %cst_56 = arith.constant dense<0.000000e+00> : vector<32x128xf32>
    %167 = tpu.matmul %165, %166, %cst_56 {dimension_numbers = #tpu.dot_dimension_numbers<[1], [0], [0], [1], [0, 0, 1, 1], [], []>} : vector<32x256xbf16>, vector<256x128xbf16>, vector<32x128xf32> -> vector<32x128xf32>
    %c0_57 = arith.constant 0 : index
    %c0_58 = arith.constant 0 : index
    %168 = vector.load %arg12[%c0_57, %c0_58] : memref<1x128xf32, #tpu.memory_space<vmem>>, vector<1x128xf32>
    %169 = vector.broadcast %168 : vector<1x128xf32> to vector<32x128xf32>
    %170 = arith.addf %167, %169 : vector<32x128xf32>
    %171 = arith.addf %121, %170 : vector<32x128xf32>
    %c0_59 = arith.constant 0 : index
    %c0_60 = arith.constant 0 : index
    %172 = vector.load %arg13[%c0_59, %c0_60] : memref<32x128xf32, #tpu.memory_space<vmem>>, vector<32x128xf32>
    tpu.vector_store %arg13[%c0_59, %c0_60], %171 {strides = array<i32>} : memref<32x128xf32, #tpu.memory_space<vmem>>, vector<32x128xf32>,
    return
  }
}

</mosaic_0001>

<llo_original>
// kernel: tpu_custom_call.1
$region0: #{tpu_custom_call.1}
  #allocation0 [shape = 'u32[]', space=smem, size = 0x4, offset = 0x4, fixed_abs, tag = 'smem constant byte address 0x4 - core index']
  #allocation1 [shape = 'u32[144,128]{1,0:T(1,128)}', space=vmem, size = 0x12000, scoped, tag = 'internal scratch']
  %s0 = inlined_call_operand.hbm [shape: f32[32,128], index: 0, kind: input, shape index: {}]
  %s1 = inlined_call_operand.vmem [shape: f32[1,128], index: 1, kind: input, shape index: {}]
  %s2 = inlined_call_operand.vmem [shape: f32[1,128], index: 2, kind: input, shape index: {}]
  %s3 = inlined_call_operand.hbm [shape: bf16[128,384], index: 3, kind: input, shape index: {}]
  %s4 = inlined_call_operand.vmem [shape: f32[1,384], index: 4, kind: input, shape index: {}]
  %s5 = inlined_call_operand.hbm [shape: bf16[128,128], index: 5, kind: input, shape index: {}]
  %s6 = inlined_call_operand.vmem [shape: f32[1,128], index: 6, kind: input, shape index: {}]
  %s7 = inlined_call_operand.vmem [shape: f32[1,128], index: 7, kind: input, shape index: {}]
  %s8 = inlined_call_operand.vmem [shape: f32[1,128], index: 8, kind: input, shape index: {}]
  %s9 = inlined_call_operand.hbm [shape: bf16[128,256], index: 9, kind: input, shape index: {}]
  %s10 = inlined_call_operand.vmem [shape: f32[1,256], index: 10, kind: input, shape index: {}]
  %s11 = inlined_call_operand.hbm [shape: bf16[256,128], index: 11, kind: input, shape index: {}]
  %s12 = inlined_call_operand.vmem [shape: f32[1,128], index: 12, kind: input, shape index: {}]
  %s13 = inlined_call_operand.hbm [shape: f32[32,128], index: 13, kind: output, shape index: {}]
  %s14 = sld [smem:[#allocation0]]
  $region82: #{tpu_custom_call.1} parent=0
    _
  %s16 = ssub.s32 1, %s14
  %s17 = scalar_select 0, %s16, %s14
  $region1: #{tpu_custom_call.1} parent=0
    #allocation2 [shape = 'u8[16384]{0}', space=vmem, size = 0x4000, scoped, tag = 'input window, operand 0, single buffered']
    #allocation3 [shape = 's32[1]{0}', space=sflag, size = 0x4, scoped, tag = 'scoped memory for tpu_custom_call.1']
    #allocation4 [shape = 's32[1]{0}', space=sflag, size = 0x4, scoped, tag = 'scoped memory for tpu_custom_call.1']
    #allocation5 [shape = 'u8[98304]{0}', space=vmem, size = 0x18000, scoped, tag = 'input window, operand 3, single buffered']
    #allocation6 [shape = 's32[1]{0}', space=sflag, size = 0x4, scoped, tag = 'scoped memory for tpu_custom_call.1']
    #allocation7 [shape = 'u8[32768]{0}', space=vmem, size = 0x8000, scoped, tag = 'input window, operand 5, single buffered']
    #allocation8 [shape = 'u8[65536]{0}', space=vmem, size = 0x10000, scoped, tag = 'input window, operand 9, single buffered']
    #allocation9 [shape = 's32[1]{0}', space=sflag, size = 0x4, scoped, tag = 'scoped memory for tpu_custom_call.1']
    #allocation10 [shape = 'u8[65536]{0}', space=vmem, size = 0x10000, scoped, tag = 'input window, operand 11, single buffered']
    #allocation11 [shape = 'u8[16384]{0}', space=vmem, size = 0x4000, scoped, tag = 'output window, operand 0, single buffered']
    %18 = vsyncpa [#allocation3], 0
    %19 = vsyncpa [#allocation6], 0
    %20 = vsyncpa [#allocation9], 0
    %21 = vsyncpa [#allocation4], 0
    // Predicated region
    $region2: #{tpu_custom_call.1} parent=1 // pred_check
      _
    $region3: #{tpu_custom_call.1} parent=1 // pred_check_branch
      %23 = sbr.rel (0) target = $region5
    $region4: #{tpu_custom_call.1} parent=1 // pred_region
      %s25 = ssub.s32 512, 512
      %26 = vsyncadd [#allocation3], %s25
      %s27 = sshll.u32 [#allocation2], 4
      %s28 = int_to_ptr.vmem [resolvable:$true] %s27
      %33 = dma.hbm_to_vmem [thread:$0]  %s0, 512, %s28, [#allocation3], 128, 128, 8
    $region5: #{tpu_custom_call.1} parent=1 // pred_fallthru
      _
    // Predicated region
    $region6: #{tpu_custom_call.1} parent=1 // pred_check
      _
    $region7: #{tpu_custom_call.1} parent=1 // pred_check_branch
      %35 = sbr.rel (0) target = $region9
    $region8: #{tpu_custom_call.1} parent=1 // pred_region
      _
    $region9: #{tpu_custom_call.1} parent=1 // pred_fallthru
      _
    // Predicated region
    $region10: #{tpu_custom_call.1} parent=1 // pred_check
      _
    $region11: #{tpu_custom_call.1} parent=1 // pred_check_branch
      %37 = sbr.rel (0) target = $region13
    $region12: #{tpu_custom_call.1} parent=1 // pred_region
      _
    $region13: #{tpu_custom_call.1} parent=1 // pred_fallthru
      _
    // Predicated region
    $region14: #{tpu_custom_call.1} parent=1 // pred_check
      _
    $region15: #{tpu_custom_call.1} parent=1 // pred_check_branch
      %39 = sbr.rel (0) target = $region17
    $region16: #{tpu_custom_call.1} parent=1 // pred_region
      %s41 = ssub.s32 3072, 3072
      %42 = vsyncadd [#allocation6], %s41
      %s43 = sshll.u32 [#allocation5], 4
      %s44 = int_to_ptr.vmem [resolvable:$true] %s43
      %49 = dma.hbm_to_vmem [thread:$0]  %s3, 3072, %s44, [#allocation6], 192, 192, 12
    $region17: #{tpu_custom_call.1} parent=1 // pred_fallthru
      _
    // Predicated region
    $region18: #{tpu_custom_call.1} parent=1 // pred_check
      _
    $region19: #{tpu_custom_call.1} parent=1 // pred_check_branch
      %51 = sbr.rel (0) target = $region21
    $region20: #{tpu_custom_call.1} parent=1 // pred_region
      _
    $region21: #{tpu_custom_call.1} parent=1 // pred_fallthru
      _
    // Predicated region
    $region22: #{tpu_custom_call.1} parent=1 // pred_check
      _
    $region23: #{tpu_custom_call.1} parent=1 // pred_check_branch
      %53 = sbr.rel (0) target = $region25
    $region24: #{tpu_custom_call.1} parent=1 // pred_region
      %s55 = ssub.s32 1024, 1024
      %56 = vsyncadd [#allocation6], %s55
      %s57 = sshll.u32 [#allocation7], 4
      %s58 = int_to_ptr.vmem [resolvable:$true] %s57
      %63 = dma.hbm_to_vmem [thread:$0]  %s5, 1024, %s58, [#allocation6], 64, 64, 4
    $region25: #{tpu_custom_call.1} parent=1 // pred_fallthru
      _
    // Predicated region
    $region26: #{tpu_custom_call.1} parent=1 // pred_check
      _
    $region27: #{tpu_custom_call.1} parent=1 // pred_check_branch
      %65 = sbr.rel (0) target = $region29
    $region28: #{tpu_custom_call.1} parent=1 // pred_region
      _
    $region29: #{tpu_custom_call.1} parent=1 // pred_fallthru
      _
    // Predicated region
    $region30: #{tpu_custom_call.1} parent=1 // pred_check
      _
    $region31: #{tpu_custom_call.1} parent=1 // pred_check_branch
      %67 = sbr.rel (0) target = $region33
    $region32: #{tpu_custom_call.1} parent=1 // pred_region
      _
    $region33: #{tpu_custom_call.1} parent=1 // pred_fallthru
      _
    // Predicated region
    $region34: #{tpu_custom_call.1} parent=1 // pred_check
      _
    $region35: #{tpu_custom_call.1} parent=1 // pred_check_branch
      %69 = sbr.rel (0) target = $region37
    $region36: #{tpu_custom_call.1} parent=1 // pred_region
      _
    $region37: #{tpu_custom_call.1} parent=1 // pred_fallthru
      _
    // Predicated region
    $region38: #{tpu_custom_call.1} parent=1 // pred_check
      _
    $region39: #{tpu_custom_call.1} parent=1 // pred_check_branch
      %71 = sbr.rel (0) target = $region41
    $region40: #{tpu_custom_call.1} parent=1 // pred_region
      %s73 = ssub.s32 2048, 2048
      %74 = vsyncadd [#allocation9], %s73
      %s75 = sshll.u32 [#allocation8], 4
      %s76 = int_to_ptr.vmem [resolvable:$true] %s75
      %81 = dma.hbm_to_vmem [thread:$0]  %s9, 2048, %s76, [#allocation9], 128, 128, 8
    $region41: #{tpu_custom_call.1} parent=1 // pred_fallthru
      _
    // Predicated region
    $region42: #{tpu_custom_call.1} parent=1 // pred_check
      _
    $region43: #{tpu_custom_call.1} parent=1 // pred_check_branch
      %83 = sbr.rel (0) target = $region45
    $region44: #{tpu_custom_call.1} parent=1 // pred_region
      _
    $region45: #{tpu_custom_call.1} parent=1 // pred_fallthru
      _
    // Predicated region
    $region46: #{tpu_custom_call.1} parent=1 // pred_check
      _
    $region47: #{tpu_custom_call.1} parent=1 // pred_check_branch
      %85 = sbr.rel (0) target = $region49
    $region48: #{tpu_custom_call.1} parent=1 // pred_region
      %s87 = ssub.s32 2048, 2048
      %88 = vsyncadd [#allocation9], %s87
      %s89 = sshll.u32 [#allocation10], 4
      %s90 = int_to_ptr.vmem [resolvable:$true] %s89
      %95 = dma.hbm_to_vmem [thread:$0]  %s11, 2048, %s90, [#allocation9], 64, 64, 4
    $region49: #{tpu_custom_call.1} parent=1 // pred_fallthru
      _
    // Predicated region
    $region50: #{tpu_custom_call.1} parent=1 // pred_check
      _
    $region51: #{tpu_custom_call.1} parent=1 // pred_check_branch
      %97 = sbr.rel (0) target = $region53
    $region52: #{tpu_custom_call.1} parent=1 // pred_region
      _
    $region53: #{tpu_custom_call.1} parent=1 // pred_fallthru
      _
    // Predicated region
    $region54: #{tpu_custom_call.1} parent=1 // pred_check
      _
    $region55: #{tpu_custom_call.1} parent=1 // pred_check_branch
      %99 = sbr.rel (0) target = $region57
    $region56: #{tpu_custom_call.1} parent=1 // pred_region
      %100 = dma.done [#allocation3], 512
    $region57: #{tpu_custom_call.1} parent=1 // pred_fallthru
      _
    // Predicated region
    $region58: #{tpu_custom_call.1} parent=1 // pred_check
      _
    $region59: #{tpu_custom_call.1} parent=1 // pred_check_branch
      %102 = sbr.rel (0) target = $region61
    $region60: #{tpu_custom_call.1} parent=1 // pred_region
      %103 = dma.done [#allocation6], 3072
    $region61: #{tpu_custom_call.1} parent=1 // pred_fallthru
      _
    // Predicated region
    $region62: #{tpu_custom_call.1} parent=1 // pred_check
      _
    $region63: #{tpu_custom_call.1} parent=1 // pred_check_branch
      %105 = sbr.rel (0) target = $region65
    $region64: #{tpu_custom_call.1} parent=1 // pred_region
      %106 = dma.done [#allocation6], 1024
    $region65: #{tpu_custom_call.1} parent=1 // pred_fallthru
      _
    // Predicated region
    $region66: #{tpu_custom_call.1} parent=1 // pred_check
      _
    $region67: #{tpu_custom_call.1} parent=1 // pred_check_branch
      %108 = sbr.rel (0) target = $region69
    $region68: #{tpu_custom_call.1} parent=1 // pred_region
      %109 = dma.done [#allocation9], 2048
    $region69: #{tpu_custom_call.1} parent=1 // pred_fallthru
      _
    // Predicated region
    $region70: #{tpu_custom_call.1} parent=1 // pred_check
      _
    $region71: #{tpu_custom_call.1} parent=1 // pred_check_branch
      %111 = sbr.rel (0) target = $region73
    $region72: #{tpu_custom_call.1} parent=1 // pred_region
      %112 = dma.done [#allocation9], 2048
    $region73: #{tpu_custom_call.1} parent=1 // pred_fallthru
      _
    %v114 = vld [vmem:[#allocation2] sm:$0xff]
    %v115 = vld [vmem:[#allocation2 + $0x8] sm:$0xff]
    %v116 = vld [vmem:[#allocation2 + $0x10] sm:$0xff]
    %v117 = vld [vmem:[#allocation2 + $0x18] sm:$0xff]
    %v118 = vld [vmem:[%s1] sm:$0x1]
    %v119 = vld [vmem:[%s2] sm:$0x1]
    %120 = vadd.xlane.f32.xlu0 %v114
    %v121 = vpop.xlane.xlu0 %120
    %122 = vadd.xlane.f32.xlu0 %v115
    %v123 = vpop.xlane.xlu0 %122
    %124 = vadd.xlane.f32.xlu0 %v116
    %v125 = vpop.xlane.xlu0 %124
    %126 = vadd.xlane.f32.xlu0 %v117
    %v127 = vpop.xlane.xlu0 %126
    %v128 = vrcp.pop 128.0
    %v129 = vmul.f32 %v121, %v128
    %v130 = vmul.f32 %v123, %v128
    %v131 = vmul.f32 %v125, %v128
    %v132 = vmul.f32 %v127, %v128
    %v133 = vsub.f32 %v114, %v129
    %v134 = vsub.f32 %v115, %v130
    %v135 = vsub.f32 %v116, %v131
    %v136 = vsub.f32 %v117, %v132
    %v137 = vmul.f32 %v133, %v133
    %v138 = vmul.f32 %v134, %v134
    %v139 = vmul.f32 %v135, %v135
    %v140 = vmul.f32 %v136, %v136
    %141 = vadd.xlane.f32.xlu0 %v137
    %v142 = vpop.xlane.xlu0 %141
    %143 = vadd.xlane.f32.xlu0 %v138
    %v144 = vpop.xlane.xlu0 %143
    %145 = vadd.xlane.f32.xlu0 %v139
    %v146 = vpop.xlane.xlu0 %145
    %147 = vadd.xlane.f32.xlu0 %v140
    %v148 = vpop.xlane.xlu0 %147
    %v149 = vmul.f32 %v142, %v128
    %v150 = vmul.f32 %v144, %v128
    %v151 = vmul.f32 %v146, %v128
    %v152 = vmul.f32 %v148, %v128
    %v153 = vadd.f32 %v149, 1e-06
    %v154 = vadd.f32 %v150, 1e-06
    %v155 = vadd.f32 %v151, 1e-06
    %v156 = vadd.f32 %v152, 1e-06
    %v157 = vrsqrt.pop %v153
    %v158 = vrsqrt.pop %v154
    %v159 = vrsqrt.pop %v155
    %v160 = vrsqrt.pop %v156
    %v161 = vmul.f32 %v133, %v157
    %v162 = vmul.f32 %v134, %v158
    %v163 = vmul.f32 %v135, %v159
    %v164 = vmul.f32 %v136, %v160
    %v166 = vlaneseq
    %v167 = vshrl.u32 %v166, 7
    %v168 = vsub.s32 0, %v167
    %v169 = vrot.slane %v118, %v168
    %v171 = vmul.f32 %v161, %v169
    %v172 = vmul.f32 %v162, %v169
    %v173 = vmul.f32 %v163, %v169
    %v174 = vmul.f32 %v164, %v169
    %v176 = vlaneseq
    %v177 = vshrl.u32 %v176, 7
    %v178 = vsub.s32 0, %v177
    %v179 = vrot.slane %v119, %v178
    %v181 = vadd.f32 %v171, %v179
    %v182 = vadd.f32 %v172, %v179
    %v183 = vadd.f32 %v173, %v179
    %v184 = vadd.f32 %v174, %v179
    %v185 = vpack.c.bf16 %v182, %v181
    %v186 = vpack.c.bf16 %v184, %v183
    %v187 = vld [vmem:[#allocation5] sm:$0xff]
    %v188 = vld [vmem:[#allocation5 + $0x8] sm:$0xf]
    %v189 = vld [vmem:[#allocation5 + $0xc] sm:$0xff]
    %v190 = vld [vmem:[#allocation5 + $0x14] sm:$0xf]
    %v191 = vld [vmem:[#allocation5 + $0x18] sm:$0xff]
    %v192 = vld [vmem:[#allocation5 + $0x20] sm:$0xf]
    %v193 = vld [vmem:[#allocation5 + $0x24] sm:$0xff]
    %v194 = vld [vmem:[#allocation5 + $0x2c] sm:$0xf]
    %v195 = vld [vmem:[#allocation5 + $0x30] sm:$0xff]
    %v196 = vld [vmem:[#allocation5 + $0x38] sm:$0xf]
    %v197 = vld [vmem:[#allocation5 + $0x3c] sm:$0xff]
    %v198 = vld [vmem:[#allocation5 + $0x44] sm:$0xf]
    %v199 = vld [vmem:[#allocation5 + $0x48] sm:$0xff]
    %v200 = vld [vmem:[#allocation5 + $0x50] sm:$0xf]
    %v201 = vld [vmem:[#allocation5 + $0x54] sm:$0xff]
    %v202 = vld [vmem:[#allocation5 + $0x5c] sm:$0xf]
    %v203 = vld [vmem:[#allocation5 + $0x60] sm:$0xff]
    %v204 = vld [vmem:[#allocation5 + $0x68] sm:$0xf]
    %v205 = vld [vmem:[#allocation5 + $0x6c] sm:$0xff]
    %v206 = vld [vmem:[#allocation5 + $0x74] sm:$0xf]
    %v207 = vld [vmem:[#allocation5 + $0x78] sm:$0xff]
    %v208 = vld [vmem:[#allocation5 + $0x80] sm:$0xf]
    %v209 = vld [vmem:[#allocation5 + $0x84] sm:$0xff]
    %v210 = vld [vmem:[#allocation5 + $0x8c] sm:$0xf]
    %v211 = vld [vmem:[#allocation5 + $0x90] sm:$0xff]
    %v212 = vld [vmem:[#allocation5 + $0x98] sm:$0xf]
    %v213 = vld [vmem:[#allocation5 + $0x9c] sm:$0xff]
    %v214 = vld [vmem:[#allocation5 + $0xa4] sm:$0xf]
    %v215 = vld [vmem:[#allocation5 + $0xa8] sm:$0xff]
    %v216 = vld [vmem:[#allocation5 + $0xb0] sm:$0xf]
    %v217 = vld [vmem:[#allocation5 + $0xb4] sm:$0xff]
    %v218 = vld [vmem:[#allocation5 + $0xbc] sm:$0xf]
    %v219 = vld [vmem:[%s4] sm:$0x7]
    %v221 = vlaneseq
    %v222 = vshrl.u32 %v221, 7
    %v223 = vsub.s32 0, %v222
    %v224 = vrot.slane %v219, %v223
    %v225 = vlaneseq
    %v226 = vshrl.u32 %v225, 7
    %v227 = vsub.s32 1, %v226
    %v228 = vrot.slane %v219, %v227
    %v229 = vlaneseq
    %v230 = vshrl.u32 %v229, 7
    %v231 = vsub.s32 2, %v230
    %v232 = vrot.slane %v219, %v231
    %v268 = vunpack.c.l.b16 %v187
    %v269 = vunpack.c.h.b16 %v187
    %v270 = vunpack.c.l.b16 %v188
    %v271 = vunpack.c.l.b16 %v189
    %v272 = vunpack.c.h.b16 %v189
    %v273 = vunpack.c.l.b16 %v190
    %v274 = vunpack.c.l.b16 %v191
    %v275 = vunpack.c.h.b16 %v191
    %v276 = vunpack.c.l.b16 %v192
    %v277 = vunpack.c.l.b16 %v193
    %v278 = vunpack.c.h.b16 %v193
    %v279 = vunpack.c.l.b16 %v194
    %v280 = vunpack.c.l.b16 %v195
    %v281 = vunpack.c.h.b16 %v195
    %v282 = vunpack.c.l.b16 %v196
    %v283 = vunpack.c.l.b16 %v197
    %v284 = vunpack.c.h.b16 %v197
    %v285 = vunpack.c.l.b16 %v198
    %v286 = vunpack.c.l.b16 %v199
    %v287 = vunpack.c.h.b16 %v199
    %v288 = vunpack.c.l.b16 %v200
    %v289 = vunpack.c.l.b16 %v201
    %v290 = vunpack.c.h.b16 %v201
    %v291 = vunpack.c.l.b16 %v202
    %v292 = vunpack.c.l.b16 %v203
    %v293 = vunpack.c.h.b16 %v203
    %v294 = vunpack.c.l.b16 %v204
    %v295 = vunpack.c.l.b16 %v205
    %v296 = vunpack.c.h.b16 %v205
    %v297 = vunpack.c.l.b16 %v206
    %v298 = vunpack.c.l.b16 %v207
    %v299 = vunpack.c.h.b16 %v207
    %v300 = vunpack.c.l.b16 %v208
    %v301 = vunpack.c.l.b16 %v209
    %v302 = vunpack.c.h.b16 %v209
    %v303 = vunpack.c.l.b16 %v210
    %v304 = vunpack.c.l.b16 %v211
    %v305 = vunpack.c.h.b16 %v211
    %v306 = vunpack.c.l.b16 %v212
    %v307 = vunpack.c.l.b16 %v213
    %v308 = vunpack.c.h.b16 %v213
    %v309 = vunpack.c.l.b16 %v214
    %v310 = vunpack.c.l.b16 %v215
    %v311 = vunpack.c.h.b16 %v215
    %v312 = vunpack.c.l.b16 %v216
    %v313 = vunpack.c.l.b16 %v217
    %v314 = vunpack.c.h.b16 %v217
    %v315 = vunpack.c.l.b16 %v218
    %v316 = vpack.c.b16 %v271, %v268
    %v317 = vpack.c.b16 %v272, %v269
    %v318 = vpack.c.b16 %v273, %v270
    %v319 = vpack.c.b16 %v277, %v274
    %v320 = vpack.c.b16 %v278, %v275
    %v321 = vpack.c.b16 %v279, %v276
    %v322 = vpack.c.b16 %v283, %v280
    %v323 = vpack.c.b16 %v284, %v281
    %v324 = vpack.c.b16 %v285, %v282
    %v325 = vpack.c.b16 %v289, %v286
    %v326 = vpack.c.b16 %v290, %v287
    %v327 = vpack.c.b16 %v291, %v288
    %v328 = vpack.c.b16 %v295, %v292
    %v329 = vpack.c.b16 %v296, %v293
    %v330 = vpack.c.b16 %v297, %v294
    %v331 = vpack.c.b16 %v301, %v298
    %v332 = vpack.c.b16 %v302, %v299
    %v333 = vpack.c.b16 %v303, %v300
    %v334 = vpack.c.b16 %v307, %v304
    %v335 = vpack.c.b16 %v308, %v305
    %v336 = vpack.c.b16 %v309, %v306
    %v337 = vpack.c.b16 %v313, %v310
    %v338 = vpack.c.b16 %v314, %v311
    %v339 = vpack.c.b16 %v315, %v312
    %364 = vmatprep.subr.bf16.mxu0 %v317
    %365 = vmatpush1.bf16.msra.mxu0 %v316
    %366 = vmatprep.subr.bf16.mxu0 %v320
    %367 = vmatpush1.bf16.msra.mxu0 %v319
    %368 = vmatprep.subr.bf16.mxu0 %v323
    %369 = vmatpush1.bf16.msra.mxu0 %v322
    %370 = vmatprep.subr.bf16.mxu0 %v326
    %371 = vmatpush1.bf16.msra.mxu0 %v325
    %372 = vmatprep.subr.bf16.mxu0 %v329
    %373 = vmatpush1.bf16.msra.mxu0 %v328
    %374 = vmatprep.subr.bf16.mxu0 %v332
    %375 = vmatpush1.bf16.msra.mxu0 %v331
    %376 = vmatprep.subr.bf16.mxu0 %v335
    %377 = vmatpush1.bf16.msra.mxu0 %v334
    %378 = vmatprep.subr.bf16.mxu0 %v338
    %379 = vmatpush1.bf16.msra.mxu0 %v337
    %380 = vmatprep.subr.bf16.mxu0 0
    %381 = vmatpush1.bf16.msra.mxu0 0
    %382 = vmatprep.subr.bf16.mxu0 0
    %383 = vmatpush1.bf16.msra.mxu0 0
    %384 = vmatprep.subr.bf16.mxu0 0
    %385 = vmatpush1.bf16.msra.mxu0 0
    %386 = vmatprep.subr.bf16.mxu0 0
    %387 = vmatpush1.bf16.msra.mxu0 0
    %388 = vmatprep.subr.bf16.mxu0 0
    %389 = vmatpush1.bf16.msra.mxu0 0
    %390 = vmatprep.subr.bf16.mxu0 0
    %391 = vmatpush1.bf16.msra.mxu0 0
    %392 = vmatprep.subr.bf16.mxu0 0
    %393 = vmatpush1.bf16.msra.mxu0 0
    %394 = vmatprep.subr.bf16.mxu0 0
    %395 = vmatpush1.bf16.msra.mxu0 0
    %396 = vmatprep.mubr.bf16.mxu0 0
    %397 = vmatmul.mubr.bf16.gmra.mrb[0].mxu0 %v185
    %v398 = vpop.f32.mrb[0].mxu0
    %v399 = vadd.f32 %v224, %v398
    %v400 = vpop.f32.mrb[0].mxu0
    %v401 = vadd.f32 %v228, %v400
    %v402 = vpop.f32.mrb[0].mxu0
    %v403 = vadd.f32 %v224, %v402
    %v404 = vpop.f32.mrb[0].mxu0
    %v405 = vadd.f32 %v228, %v404
    %406 = vmatprep.mubr.bf16.mxu0 0
    %407 = vmatmul.mubr.bf16.gmra.mrb[0].mxu0 %v186
    %v408 = vpop.f32.mrb[0].mxu0
    %v409 = vadd.f32 %v224, %v408
    %v410 = vpop.f32.mrb[0].mxu0
    %v411 = vadd.f32 %v228, %v410
    %v412 = vpop.f32.mrb[0].mxu0
    %v413 = vadd.f32 %v224, %v412
    %v414 = vpop.f32.mrb[0].mxu0
    %v415 = vadd.f32 %v228, %v414
    %416 = vdwg.mxu0
    %417 = vmatprep.subr.bf16.mxu0 0
    %418 = vmatpush1.bf16.msra.mxu0 %v318
    %419 = vmatprep.subr.bf16.mxu0 0
    %420 = vmatpush1.bf16.msra.mxu0 %v321
    %421 = vmatprep.subr.bf16.mxu0 0
    %422 = vmatpush1.bf16.msra.mxu0 %v324
    %423 = vmatprep.subr.bf16.mxu0 0
    %424 = vmatpush1.bf16.msra.mxu0 %v327
    %425 = vmatprep.subr.bf16.mxu0 0
    %426 = vmatpush1.bf16.msra.mxu0 %v330
    %427 = vmatprep.subr.bf16.mxu0 0
    %428 = vmatpush1.bf16.msra.mxu0 %v333
    %429 = vmatprep.subr.bf16.mxu0 0
    %430 = vmatpush1.bf16.msra.mxu0 %v336
    %431 = vmatprep.subr.bf16.mxu0 0
    %432 = vmatpush1.bf16.msra.mxu0 %v339
    %433 = vmatprep.subr.bf16.mxu0 0
    %434 = vmatpush1.bf16.msra.mxu0 0
    %435 = vmatprep.subr.bf16.mxu0 0
    %436 = vmatpush1.bf16.msra.mxu0 0
    %437 = vmatprep.subr.bf16.mxu0 0
    %438 = vmatpush1.bf16.msra.mxu0 0
    %439 = vmatprep.subr.bf16.mxu0 0
    %440 = vmatpush1.bf16.msra.mxu0 0
    %441 = vmatprep.subr.bf16.mxu0 0
    %442 = vmatpush1.bf16.msra.mxu0 0
    %443 = vmatprep.subr.bf16.mxu0 0
    %444 = vmatpush1.bf16.msra.mxu0 0
    %445 = vmatprep.subr.bf16.mxu0 0
    %446 = vmatpush1.bf16.msra.mxu0 0
    %447 = vmatprep.subr.bf16.mxu0 0
    %448 = vmatpush1.bf16.msra.mxu0 0
    %449 = vmatprep.mubr.bf16.mxu0 0
    %450 = vmatmul.mubr.bf16.gmra.mrb[0].mxu0 %v185
    %v451 = vpop.f32.mrb[0].mxu0
    %v452 = vadd.f32 %v232, %v451
    %v453 = vpop.f32.mrb[0].mxu0
    %v454 = vpop.f32.mrb[0].mxu0
    %v455 = vadd.f32 %v232, %v454
    %v456 = vpop.f32.mrb[0].mxu0
    %457 = vmatprep.mubr.bf16.mxu0 0
    %458 = vmatmul.mubr.bf16.gmra.mrb[0].mxu0 %v186
    %v459 = vpop.f32.mrb[0].mxu0
    %v460 = vadd.f32 %v232, %v459
    %v461 = vpop.f32.mrb[0].mxu0
    %v462 = vpop.f32.mrb[0].mxu0
    %v463 = vadd.f32 %v232, %v462
    %v464 = vpop.f32.mrb[0].mxu0
    %465 = vdwg.mxu0
    %v466 = vmul.f32 %v399, 0.17677669
    %v467 = vmul.f32 %v403, 0.17677669
    %v468 = vmul.f32 %v409, 0.17677669
    %v469 = vmul.f32 %v413, 0.17677669
    %v470 = vpack.c.bf16 %v467, %v466
    %v471 = vpack.c.bf16 %v469, %v468
    %v472 = vpack.c.bf16 %v405, %v401
    %v473 = vpack.c.bf16 %v415, %v411
    %v474 = vpack.c.bf16 %v455, %v452
    %v475 = vpack.c.bf16 %v463, %v460
    %vm476 = vcmask 261120
    %v478 = vsel %vm476, %v470, 0
    %v481 = vsel %vm476, %v472, 0
    %483 = vmatprep.subr.bf16.mxu0 0
    %484 = vmatpush1.bf16.xpose.msra.mxu0 %v481
    %485 = vmatprep.subr.bf16.mxu0 0
    %486 = vmatpush1.bf16.xpose.msra.mxu0 0
    %487 = vmatprep.subr.bf16.mxu0 0
    %488 = vmatpush1.bf16.xpose.msra.mxu0 0
    %489 = vmatprep.subr.bf16.mxu0 0
    %490 = vmatpush1.bf16.xpose.msra.mxu0 0
    %491 = vmatprep.subr.bf16.mxu0 0
    %492 = vmatpush1.bf16.xpose.msra.mxu0 0
    %493 = vmatprep.subr.bf16.mxu0 0
    %494 = vmatpush1.bf16.xpose.msra.mxu0 0
    %495 = vmatprep.subr.bf16.mxu0 0
    %496 = vmatpush1.bf16.xpose.msra.mxu0 0
    %497 = vmatprep.subr.bf16.mxu0 0
    %498 = vmatpush1.bf16.xpose.msra.mxu0 0
    %499 = vmatprep.subr.bf16.mxu0 0
    %500 = vmatpush1.bf16.xpose.msra.mxu0 0
    %501 = vmatprep.subr.bf16.mxu0 0
    %502 = vmatpush1.bf16.xpose.msra.mxu0 0
    %503 = vmatprep.subr.bf16.mxu0 0
    %504 = vmatpush1.bf16.xpose.msra.mxu0 0
    %505 = vmatprep.subr.bf16.mxu0 0
    %506 = vmatpush1.bf16.xpose.msra.mxu0 0
    %507 = vmatprep.subr.bf16.mxu0 0
    %508 = vmatpush1.bf16.xpose.msra.mxu0 0
    %509 = vmatprep.subr.bf16.mxu0 0
    %510 = vmatpush1.bf16.xpose.msra.mxu0 0
    %511 = vmatprep.subr.bf16.mxu0 0
    %512 = vmatpush1.bf16.xpose.msra.mxu0 0
    %513 = vmatprep.subr.bf16.mxu0 0
    %514 = vmatpush1.bf16.xpose.msra.mxu0 0
    %515 = vmatprep.mubr.bf16.mxu0 0
    %516 = vmatmul.mubr.bf16.gmra.mrb[0].mxu0 %v478
    %v517 = vpop.f32.mrb[0].mxu0
    %v518 = vadd.f32 0.0, %v517
    %v519 = vpop.f32.mrb[0].mxu0
    %v520 = vpop.f32.mrb[0].mxu0
    %v521 = vadd.f32 0.0, %v520
    %v522 = vpop.f32.mrb[0].mxu0
    %523 = vdwg.mxu0
    %v525 = vsel %vm476, %v471, 0
    %v528 = vsel %vm476, %v473, 0
    %530 = vmatprep.subr.bf16.mxu0 0
    %531 = vmatpush1.bf16.xpose.msra.mxu0 %v528
    %532 = vmatprep.subr.bf16.mxu0 0
    %533 = vmatpush1.bf16.xpose.msra.mxu0 0
    %534 = vmatprep.subr.bf16.mxu0 0
    %535 = vmatpush1.bf16.xpose.msra.mxu0 0
    %536 = vmatprep.subr.bf16.mxu0 0
    %537 = vmatpush1.bf16.xpose.msra.mxu0 0
    %538 = vmatprep.subr.bf16.mxu0 0
    %539 = vmatpush1.bf16.xpose.msra.mxu0 0
    %540 = vmatprep.subr.bf16.mxu0 0
    %541 = vmatpush1.bf16.xpose.msra.mxu0 0
    %542 = vmatprep.subr.bf16.mxu0 0
    %543 = vmatpush1.bf16.xpose.msra.mxu0 0
    %544 = vmatprep.subr.bf16.mxu0 0
    %545 = vmatpush1.bf16.xpose.msra.mxu0 0
    %546 = vmatprep.subr.bf16.mxu0 0
    %547 = vmatpush1.bf16.xpose.msra.mxu0 0
    %548 = vmatprep.subr.bf16.mxu0 0
    %549 = vmatpush1.bf16.xpose.msra.mxu0 0
    %550 = vmatprep.subr.bf16.mxu0 0
    %551 = vmatpush1.bf16.xpose.msra.mxu0 0
    %552 = vmatprep.subr.bf16.mxu0 0
    %553 = vmatpush1.bf16.xpose.msra.mxu0 0
    %554 = vmatprep.subr.bf16.mxu0 0
    %555 = vmatpush1.bf16.xpose.msra.mxu0 0
    %556 = vmatprep.subr.bf16.mxu0 0
    %557 = vmatpush1.bf16.xpose.msra.mxu0 0
    %558 = vmatprep.subr.bf16.mxu0 0
    %559 = vmatpush1.bf16.xpose.msra.mxu0 0
    %560 = vmatprep.subr.bf16.mxu0 0
    %561 = vmatpush1.bf16.xpose.msra.mxu0 0
    %562 = vmatprep.mubr.bf16.mxu0 0
    %563 = vmatmul.mubr.bf16.gmra.mrb[0].mxu0 %v525
    %v564 = vpop.f32.mrb[0].mxu0
    %v565 = vadd.f32 0.0, %v564
    %v566 = vpop.f32.mrb[0].mxu0
    %v567 = vpop.f32.mrb[0].mxu0
    %v568 = vadd.f32 0.0, %v567
    %v569 = vpop.f32.mrb[0].mxu0
    %570 = vdwg.mxu0
    %vm571 = vcmask 130048
    %v572 = vsel %vm571, %v518, -inf
    %573 = vmax.xlane.f32.xlu0 %v572
    %v574 = vpop.xlane.xlu0 %573
    %v575 = vsel %vm571, %v521, -inf
    %576 = vmax.xlane.f32.xlu0 %v575
    %v577 = vpop.xlane.xlu0 %576
    %v578 = vsel %vm571, %v565, -inf
    %579 = vmax.xlane.f32.xlu0 %v578
    %v580 = vpop.xlane.xlu0 %579
    %v581 = vsel %vm571, %v568, -inf
    %582 = vmax.xlane.f32.xlu0 %v581
    %v583 = vpop.xlane.xlu0 %582
    %v584 = vsub.f32 %v518, %v574
    %v585 = vsub.f32 %v521, %v577
    %v586 = vsub.f32 %v565, %v580
    %v587 = vsub.f32 %v568, %v583
    %v588 = vmul.f32 %v584, 1.442695
    %v589 = vpow.pop %v588
    %v590 = vmul.f32 %v585, 1.442695
    %v591 = vpow.pop %v590
    %v592 = vmul.f32 %v586, 1.442695
    %v593 = vpow.pop %v592
    %v594 = vmul.f32 %v587, 1.442695
    %v595 = vpow.pop %v594
    %v596 = vsel %vm571, %v589, 0.0
    %597 = vadd.xlane.f32.xlu0 %v596
    %v598 = vpop.xlane.xlu0 %597
    %v599 = vsel %vm571, %v591, 0.0
    %600 = vadd.xlane.f32.xlu0 %v599
    %v601 = vpop.xlane.xlu0 %600
    %v602 = vsel %vm571, %v593, 0.0
    %603 = vadd.xlane.f32.xlu0 %v602
    %v604 = vpop.xlane.xlu0 %603
    %v605 = vsel %vm571, %v595, 0.0
    %606 = vadd.xlane.f32.xlu0 %v605
    %v607 = vpop.xlane.xlu0 %606
    %v608 = vrcp.pop %v598
    %v609 = vrcp.pop %v601
    %v610 = vrcp.pop %v604
    %v611 = vrcp.pop %v607
    %v612 = vmul.f32 %v589, %v608
    %v613 = vmul.f32 %v591, %v609
    %v614 = vmul.f32 %v593, %v610
    %v615 = vmul.f32 %v595, %v611
    %v616 = vpack.c.bf16 %v613, %v612
    %v617 = vpack.c.bf16 %v615, %v614
    %v619 = vsel %vm571, %v616, 0
    %621 = vmatprep.subr.bf16.mxu0 0
    %622 = vmatpush1.bf16.msra.mxu0 %v474
    %623 = vmatprep.subr.bf16.mxu0 0
    %624 = vmatpush1.bf16.msra.mxu0 0
    %625 = vmatprep.subr.bf16.mxu0 0
    %626 = vmatpush1.bf16.msra.mxu0 0
    %627 = vmatprep.subr.bf16.mxu0 0
    %628 = vmatpush1.bf16.msra.mxu0 0
    %629 = vmatprep.subr.bf16.mxu0 0
    %630 = vmatpush1.bf16.msra.mxu0 0
    %631 = vmatprep.subr.bf16.mxu0 0
    %632 = vmatpush1.bf16.msra.mxu0 0
    %633 = vmatprep.subr.bf16.mxu0 0
    %634 = vmatpush1.bf16.msra.mxu0 0
    %635 = vmatprep.subr.bf16.mxu0 0
    %636 = vmatpush1.bf16.msra.mxu0 0
    %637 = vmatprep.subr.bf16.mxu0 0
    %638 = vmatpush1.bf16.msra.mxu0 0
    %639 = vmatprep.subr.bf16.mxu0 0
    %640 = vmatpush1.bf16.msra.mxu0 0
    %641 = vmatprep.subr.bf16.mxu0 0
    %642 = vmatpush1.bf16.msra.mxu0 0
    %643 = vmatprep.subr.bf16.mxu0 0
    %644 = vmatpush1.bf16.msra.mxu0 0
    %645 = vmatprep.subr.bf16.mxu0 0
    %646 = vmatpush1.bf16.msra.mxu0 0
    %647 = vmatprep.subr.bf16.mxu0 0
    %648 = vmatpush1.bf16.msra.mxu0 0
    %649 = vmatprep.subr.bf16.mxu0 0
    %650 = vmatpush1.bf16.msra.mxu0 0
    %651 = vmatprep.subr.bf16.mxu0 0
    %652 = vmatpush1.bf16.msra.mxu0 0
    %653 = vmatprep.mubr.bf16.mxu0 0
    %654 = vmatmul.mubr.bf16.gmra.mrb[0].mxu0 %v619
    %v655 = vpop.f32.mrb[0].mxu0
    %v656 = vadd.f32 0.0, %v655
    %v657 = vpop.f32.mrb[0].mxu0
    %v658 = vpop.f32.mrb[0].mxu0
    %v659 = vadd.f32 0.0, %v658
    %v660 = vpop.f32.mrb[0].mxu0
    %661 = vdwg.mxu0
    %v663 = vsel %vm571, %v617, 0
    %665 = vmatprep.subr.bf16.mxu0 0
    %666 = vmatpush1.bf16.msra.mxu0 %v475
    %667 = vmatprep.subr.bf16.mxu0 0
    %668 = vmatpush1.bf16.msra.mxu0 0
    %669 = vmatprep.subr.bf16.mxu0 0
    %670 = vmatpush1.bf16.msra.mxu0 0
    %671 = vmatprep.subr.bf16.mxu0 0
    %672 = vmatpush1.bf16.msra.mxu0 0
    %673 = vmatprep.subr.bf16.mxu0 0
    %674 = vmatpush1.bf16.msra.mxu0 0
    %675 = vmatprep.subr.bf16.mxu0 0
    %676 = vmatpush1.bf16.msra.mxu0 0
    %677 = vmatprep.subr.bf16.mxu0 0
    %678 = vmatpush1.bf16.msra.mxu0 0
    %679 = vmatprep.subr.bf16.mxu0 0
    %680 = vmatpush1.bf16.msra.mxu0 0
    %681 = vmatprep.subr.bf16.mxu0 0
    %682 = vmatpush1.bf16.msra.mxu0 0
    %683 = vmatprep.subr.bf16.mxu0 0
    %684 = vmatpush1.bf16.msra.mxu0 0
    %685 = vmatprep.subr.bf16.mxu0 0
    %686 = vmatpush1.bf16.msra.mxu0 0
    %687 = vmatprep.subr.bf16.mxu0 0
    %688 = vmatpush1.bf16.msra.mxu0 0
    %689 = vmatprep.subr.bf16.mxu0 0
    %690 = vmatpush1.bf16.msra.mxu0 0
    %691 = vmatprep.subr.bf16.mxu0 0
    %692 = vmatpush1.bf16.msra.mxu0 0
    %693 = vmatprep.subr.bf16.mxu0 0
    %694 = vmatpush1.bf16.msra.mxu0 0
    %695 = vmatprep.subr.bf16.mxu0 0
    %696 = vmatpush1.bf16.msra.mxu0 0
    %697 = vmatprep.mubr.bf16.mxu0 0
    %698 = vmatmul.mubr.bf16.gmra.mrb[0].mxu0 %v663
    %v699 = vpop.f32.mrb[0].mxu0
    %v700 = vadd.f32 0.0, %v699
    %v701 = vpop.f32.mrb[0].mxu0
    %v702 = vpop.f32.mrb[0].mxu0
    %v703 = vadd.f32 0.0, %v702
    %v704 = vpop.f32.mrb[0].mxu0
    %705 = vdwg.mxu0
    %707 = vrot.lane.b32.xlu0 %v470, 96
    %v708 = vpop.permute.xlu0 %707
    %710 = vrot.lane.b32.xlu0 %v472, 96
    %v711 = vpop.permute.xlu0 %710
    %v713 = vsel %vm476, %v708, 0
    %v716 = vsel %vm476, %v711, 0
    %718 = vmatprep.subr.bf16.mxu0 0
    %719 = vmatpush1.bf16.xpose.msra.mxu0 %v716
    %720 = vmatprep.subr.bf16.mxu0 0
    %721 = vmatpush1.bf16.xpose.msra.mxu0 0
    %722 = vmatprep.subr.bf16.mxu0 0
    %723 = vmatpush1.bf16.xpose.msra.mxu0 0
    %724 = vmatprep.subr.bf16.mxu0 0
    %725 = vmatpush1.bf16.xpose.msra.mxu0 0
    %726 = vmatprep.subr.bf16.mxu0 0
    %727 = vmatpush1.bf16.xpose.msra.mxu0 0
    %728 = vmatprep.subr.bf16.mxu0 0
    %729 = vmatpush1.bf16.xpose.msra.mxu0 0
    %730 = vmatprep.subr.bf16.mxu0 0
    %731 = vmatpush1.bf16.xpose.msra.mxu0 0
    %732 = vmatprep.subr.bf16.mxu0 0
    %733 = vmatpush1.bf16.xpose.msra.mxu0 0
    %734 = vmatprep.subr.bf16.mxu0 0
    %735 = vmatpush1.bf16.xpose.msra.mxu0 0
    %736 = vmatprep.subr.bf16.mxu0 0
    %737 = vmatpush1.bf16.xpose.msra.mxu0 0
    %738 = vmatprep.subr.bf16.mxu0 0
    %739 = vmatpush1.bf16.xpose.msra.mxu0 0
    %740 = vmatprep.subr.bf16.mxu0 0
    %741 = vmatpush1.bf16.xpose.msra.mxu0 0
    %742 = vmatprep.subr.bf16.mxu0 0
    %743 = vmatpush1.bf16.xpose.msra.mxu0 0
    %744 = vmatprep.subr.bf16.mxu0 0
    %745 = vmatpush1.bf16.xpose.msra.mxu0 0
    %746 = vmatprep.subr.bf16.mxu0 0
    %747 = vmatpush1.bf16.xpose.msra.mxu0 0
    %748 = vmatprep.subr.bf16.mxu0 0
    %749 = vmatpush1.bf16.xpose.msra.mxu0 0
    %750 = vmatprep.mubr.bf16.mxu0 0
    %751 = vmatmul.mubr.bf16.gmra.mrb[0].mxu0 %v713
    %v752 = vpop.f32.mrb[0].mxu0
    %v753 = vadd.f32 0.0, %v752
    %v754 = vpop.f32.mrb[0].mxu0
    %v755 = vpop.f32.mrb[0].mxu0
    %v756 = vadd.f32 0.0, %v755
    %v757 = vpop.f32.mrb[0].mxu0
    %758 = vdwg.mxu0
    %760 = vrot.lane.b32.xlu0 %v471, 96
    %v761 = vpop.permute.xlu0 %760
    %763 = vrot.lane.b32.xlu0 %v473, 96
    %v764 = vpop.permute.xlu0 %763
    %v766 = vsel %vm476, %v761, 0
    %v769 = vsel %vm476, %v764, 0
    %771 = vmatprep.subr.bf16.mxu0 0
    %772 = vmatpush1.bf16.xpose.msra.mxu0 %v769
    %773 = vmatprep.subr.bf16.mxu0 0
    %774 = vmatpush1.bf16.xpose.msra.mxu0 0
    %775 = vmatprep.subr.bf16.mxu0 0
    %776 = vmatpush1.bf16.xpose.msra.mxu0 0
    %777 = vmatprep.subr.bf16.mxu0 0
    %778 = vmatpush1.bf16.xpose.msra.mxu0 0
    %779 = vmatprep.subr.bf16.mxu0 0
    %780 = vmatpush1.bf16.xpose.msra.mxu0 0
    %781 = vmatprep.subr.bf16.mxu0 0
    %782 = vmatpush1.bf16.xpose.msra.mxu0 0
    %783 = vmatprep.subr.bf16.mxu0 0
    %784 = vmatpush1.bf16.xpose.msra.mxu0 0
    %785 = vmatprep.subr.bf16.mxu0 0
    %786 = vmatpush1.bf16.xpose.msra.mxu0 0
    %787 = vmatprep.subr.bf16.mxu0 0
    %788 = vmatpush1.bf16.xpose.msra.mxu0 0
    %789 = vmatprep.subr.bf16.mxu0 0
    %790 = vmatpush1.bf16.xpose.msra.mxu0 0
    %791 = vmatprep.subr.bf16.mxu0 0
    %792 = vmatpush1.bf16.xpose.msra.mxu0 0
    %793 = vmatprep.subr.bf16.mxu0 0
    %794 = vmatpush1.bf16.xpose.msra.mxu0 0
    %795 = vmatprep.subr.bf16.mxu0 0
    %796 = vmatpush1.bf16.xpose.msra.mxu0 0
    %797 = vmatprep.subr.bf16.mxu0 0
    %798 = vmatpush1.bf16.xpose.msra.mxu0 0
    %799 = vmatprep.subr.bf16.mxu0 0
    %800 = vmatpush1.bf16.xpose.msra.mxu0 0
    %801 = vmatprep.subr.bf16.mxu0 0
    %802 = vmatpush1.bf16.xpose.msra.mxu0 0
    %803 = vmatprep.mubr.bf16.mxu0 0
    %804 = vmatmul.mubr.bf16.gmra.mrb[0].mxu0 %v766
    %v805 = vpop.f32.mrb[0].mxu0
    %v806 = vadd.f32 0.0, %v805
    %v807 = vpop.f32.mrb[0].mxu0
    %v808 = vpop.f32.mrb[0].mxu0
    %v809 = vadd.f32 0.0, %v808
    %v810 = vpop.f32.mrb[0].mxu0
    %811 = vdwg.mxu0
    %v812 = vsel %vm571, %v753, -inf
    %813 = vmax.xlane.f32.xlu0 %v812
    %v814 = vpop.xlane.xlu0 %813
    %v815 = vsel %vm571, %v756, -inf
    %816 = vmax.xlane.f32.xlu0 %v815
    %v817 = vpop.xlane.xlu0 %816
    %v818 = vsel %vm571, %v806, -inf
    %819 = vmax.xlane.f32.xlu0 %v818
    %v820 = vpop.xlane.xlu0 %819
    %v821 = vsel %vm571, %v809, -inf
    %822 = vmax.xlane.f32.xlu0 %v821
    %v823 = vpop.xlane.xlu0 %822
    %v824 = vsub.f32 %v753, %v814
    %v825 = vsub.f32 %v756, %v817
    %v826 = vsub.f32 %v806, %v820
    %v827 = vsub.f32 %v809, %v823
    %v828 = vmul.f32 %v824, 1.442695
    %v829 = vpow.pop %v828
    %v830 = vmul.f32 %v825, 1.442695
    %v831 = vpow.pop %v830
    %v832 = vmul.f32 %v826, 1.442695
    %v833 = vpow.pop %v832
    %v834 = vmul.f32 %v827, 1.442695
    %v835 = vpow.pop %v834
    %v836 = vsel %vm571, %v829, 0.0
    %837 = vadd.xlane.f32.xlu0 %v836
    %v838 = vpop.xlane.xlu0 %837
    %v839 = vsel %vm571, %v831, 0.0
    %840 = vadd.xlane.f32.xlu0 %v839
    %v841 = vpop.xlane.xlu0 %840
    %v842 = vsel %vm571, %v833, 0.0
    %843 = vadd.xlane.f32.xlu0 %v842
    %v844 = vpop.xlane.xlu0 %843
    %v845 = vsel %vm571, %v835, 0.0
    %846 = vadd.xlane.f32.xlu0 %v845
    %v847 = vpop.xlane.xlu0 %846
    %v848 = vrcp.pop %v838
    %v849 = vrcp.pop %v841
    %v850 = vrcp.pop %v844
    %v851 = vrcp.pop %v847
    %v852 = vmul.f32 %v829, %v848
    %v853 = vmul.f32 %v831, %v849
    %v854 = vmul.f32 %v833, %v850
    %v855 = vmul.f32 %v835, %v851
    %v856 = vpack.c.bf16 %v853, %v852
    %v857 = vpack.c.bf16 %v855, %v854
    %859 = vrot.lane.b32.xlu0 %v474, 96
    %v860 = vpop.permute.xlu0 %859
    %v863 = vsel %vm571, %v856, 0
    %865 = vmatprep.subr.bf16.mxu0 0
    %866 = vmatpush1.bf16.msra.mxu0 %v860
    %867 = vmatprep.subr.bf16.mxu0 0
    %868 = vmatpush1.bf16.msra.mxu0 0
    %869 = vmatprep.subr.bf16.mxu0 0
    %870 = vmatpush1.bf16.msra.mxu0 0
    %871 = vmatprep.subr.bf16.mxu0 0
    %872 = vmatpush1.bf16.msra.mxu0 0
    %873 = vmatprep.subr.bf16.mxu0 0
    %874 = vmatpush1.bf16.msra.mxu0 0
    %875 = vmatprep.subr.bf16.mxu0 0
    %876 = vmatpush1.bf16.msra.mxu0 0
    %877 = vmatprep.subr.bf16.mxu0 0
    %878 = vmatpush1.bf16.msra.mxu0 0
    %879 = vmatprep.subr.bf16.mxu0 0
    %880 = vmatpush1.bf16.msra.mxu0 0
    %881 = vmatprep.subr.bf16.mxu0 0
    %882 = vmatpush1.bf16.msra.mxu0 0
    %883 = vmatprep.subr.bf16.mxu0 0
    %884 = vmatpush1.bf16.msra.mxu0 0
    %885 = vmatprep.subr.bf16.mxu0 0
    %886 = vmatpush1.bf16.msra.mxu0 0
    %887 = vmatprep.subr.bf16.mxu0 0
    %888 = vmatpush1.bf16.msra.mxu0 0
    %889 = vmatprep.subr.bf16.mxu0 0
    %890 = vmatpush1.bf16.msra.mxu0 0
    %891 = vmatprep.subr.bf16.mxu0 0
    %892 = vmatpush1.bf16.msra.mxu0 0
    %893 = vmatprep.subr.bf16.mxu0 0
    %894 = vmatpush1.bf16.msra.mxu0 0
    %895 = vmatprep.subr.bf16.mxu0 0
    %896 = vmatpush1.bf16.msra.mxu0 0
    %897 = vmatprep.mubr.bf16.mxu0 0
    %898 = vmatmul.mubr.bf16.gmra.mrb[0].mxu0 %v863
    %v899 = vpop.f32.mrb[0].mxu0
    %v900 = vadd.f32 0.0, %v899
    %v901 = vpop.f32.mrb[0].mxu0
    %v902 = vpop.f32.mrb[0].mxu0
    %v903 = vadd.f32 0.0, %v902
    %v904 = vpop.f32.mrb[0].mxu0
    %905 = vdwg.mxu0
    %907 = vrot.lane.b32.xlu0 %v475, 96
    %v908 = vpop.permute.xlu0 %907
    %v911 = vsel %vm571, %v857, 0
    %913 = vmatprep.subr.bf16.mxu0 0
    %914 = vmatpush1.bf16.msra.mxu0 %v908
    %915 = vmatprep.subr.bf16.mxu0 0
    %916 = vmatpush1.bf16.msra.mxu0 0
    %917 = vmatprep.subr.bf16.mxu0 0
    %918 = vmatpush1.bf16.msra.mxu0 0
    %919 = vmatprep.subr.bf16.mxu0 0
    %920 = vmatpush1.bf16.msra.mxu0 0
    %921 = vmatprep.subr.bf16.mxu0 0
    %922 = vmatpush1.bf16.msra.mxu0 0
    %923 = vmatprep.subr.bf16.mxu0 0
    %924 = vmatpush1.bf16.msra.mxu0 0
    %925 = vmatprep.subr.bf16.mxu0 0
    %926 = vmatpush1.bf16.msra.mxu0 0
    %927 = vmatprep.subr.bf16.mxu0 0
    %928 = vmatpush1.bf16.msra.mxu0 0
    %929 = vmatprep.subr.bf16.mxu0 0
    %930 = vmatpush1.bf16.msra.mxu0 0
    %931 = vmatprep.subr.bf16.mxu0 0
    %932 = vmatpush1.bf16.msra.mxu0 0
    %933 = vmatprep.subr.bf16.mxu0 0
    %934 = vmatpush1.bf16.msra.mxu0 0
    %935 = vmatprep.subr.bf16.mxu0 0
    %936 = vmatpush1.bf16.msra.mxu0 0
    %937 = vmatprep.subr.bf16.mxu0 0
    %938 = vmatpush1.bf16.msra.mxu0 0
    %939 = vmatprep.subr.bf16.mxu0 0
    %940 = vmatpush1.bf16.msra.mxu0 0
    %941 = vmatprep.subr.bf16.mxu0 0
    %942 = vmatpush1.bf16.msra.mxu0 0
    %943 = vmatprep.subr.bf16.mxu0 0
    %944 = vmatpush1.bf16.msra.mxu0 0
    %945 = vmatprep.mubr.bf16.mxu0 0
    %946 = vmatmul.mubr.bf16.gmra.mrb[0].mxu0 %v911
    %v947 = vpop.f32.mrb[0].mxu0
    %v948 = vadd.f32 0.0, %v947
    %v949 = vpop.f32.mrb[0].mxu0
    %v950 = vpop.f32.mrb[0].mxu0
    %v951 = vadd.f32 0.0, %v950
    %v952 = vpop.f32.mrb[0].mxu0
    %953 = vdwg.mxu0
    %954 = vrot.lane.b32.xlu0 %v470, 64
    %v955 = vpop.permute.xlu0 %954
    %956 = vrot.lane.b32.xlu0 %v472, 64
    %v957 = vpop.permute.xlu0 %956
    %v959 = vsel %vm476, %v955, 0
    %v962 = vsel %vm476, %v957, 0
    %964 = vmatprep.subr.bf16.mxu0 0
    %965 = vmatpush1.bf16.xpose.msra.mxu0 %v962
    %966 = vmatprep.subr.bf16.mxu0 0
    %967 = vmatpush1.bf16.xpose.msra.mxu0 0
    %968 = vmatprep.subr.bf16.mxu0 0
    %969 = vmatpush1.bf16.xpose.msra.mxu0 0
    %970 = vmatprep.subr.bf16.mxu0 0
    %971 = vmatpush1.bf16.xpose.msra.mxu0 0
    %972 = vmatprep.subr.bf16.mxu0 0
    %973 = vmatpush1.bf16.xpose.msra.mxu0 0
    %974 = vmatprep.subr.bf16.mxu0 0
    %975 = vmatpush1.bf16.xpose.msra.mxu0 0
    %976 = vmatprep.subr.bf16.mxu0 0
    %977 = vmatpush1.bf16.xpose.msra.mxu0 0
    %978 = vmatprep.subr.bf16.mxu0 0
    %979 = vmatpush1.bf16.xpose.msra.mxu0 0
    %980 = vmatprep.subr.bf16.mxu0 0
    %981 = vmatpush1.bf16.xpose.msra.mxu0 0
    %982 = vmatprep.subr.bf16.mxu0 0
    %983 = vmatpush1.bf16.xpose.msra.mxu0 0
    %984 = vmatprep.subr.bf16.mxu0 0
    %985 = vmatpush1.bf16.xpose.msra.mxu0 0
    %986 = vmatprep.subr.bf16.mxu0 0
    %987 = vmatpush1.bf16.xpose.msra.mxu0 0
    %988 = vmatprep.subr.bf16.mxu0 0
    %989 = vmatpush1.bf16.xpose.msra.mxu0 0
    %990 = vmatprep.subr.bf16.mxu0 0
    %991 = vmatpush1.bf16.xpose.msra.mxu0 0
    %992 = vmatprep.subr.bf16.mxu0 0
    %993 = vmatpush1.bf16.xpose.msra.mxu0 0
    %994 = vmatprep.subr.bf16.mxu0 0
    %995 = vmatpush1.bf16.xpose.msra.mxu0 0
    %996 = vmatprep.mubr.bf16.mxu0 0
    %997 = vmatmul.mubr.bf16.gmra.mrb[0].mxu0 %v959
    %v998 = vpop.f32.mrb[0].mxu0
    %v999 = vadd.f32 0.0, %v998
    %v1000 = vpop.f32.mrb[0].mxu0
    %v1001 = vpop.f32.mrb[0].mxu0
    %v1002 = vadd.f32 0.0, %v1001
    %v1003 = vpop.f32.mrb[0].mxu0
    %1004 = vdwg.mxu0
    %1005 = vrot.lane.b32.xlu0 %v471, 64
    %v1006 = vpop.permute.xlu0 %1005
    %1007 = vrot.lane.b32.xlu0 %v473, 64
    %v1008 = vpop.permute.xlu0 %1007
    %v1010 = vsel %vm476, %v1006, 0
    %v1013 = vsel %vm476, %v1008, 0
    %1015 = vmatprep.subr.bf16.mxu0 0
    %1016 = vmatpush1.bf16.xpose.msra.mxu0 %v1013
    %1017 = vmatprep.subr.bf16.mxu0 0
    %1018 = vmatpush1.bf16.xpose.msra.mxu0 0
    %1019 = vmatprep.subr.bf16.mxu0 0
    %1020 = vmatpush1.bf16.xpose.msra.mxu0 0
    %1021 = vmatprep.subr.bf16.mxu0 0
    %1022 = vmatpush1.bf16.xpose.msra.mxu0 0
    %1023 = vmatprep.subr.bf16.mxu0 0
    %1024 = vmatpush1.bf16.xpose.msra.mxu0 0
    %1025 = vmatprep.subr.bf16.mxu0 0
    %1026 = vmatpush1.bf16.xpose.msra.mxu0 0
    %1027 = vmatprep.subr.bf16.mxu0 0
    %1028 = vmatpush1.bf16.xpose.msra.mxu0 0
    %1029 = vmatprep.subr.bf16.mxu0 0
    %1030 = vmatpush1.bf16.xpose.msra.mxu0 0
    %1031 = vmatprep.subr.bf16.mxu0 0
    %1032 = vmatpush1.bf16.xpose.msra.mxu0 0
    %1033 = vmatprep.subr.bf16.mxu0 0
    %1034 = vmatpush1.bf16.xpose.msra.mxu0 0
    %1035 = vmatprep.subr.bf16.mxu0 0
    %1036 = vmatpush1.bf16.xpose.msra.mxu0 0
    %1037 = vmatprep.subr.bf16.mxu0 0
    %1038 = vmatpush1.bf16.xpose.msra.mxu0 0
    %1039 = vmatprep.subr.bf16.mxu0 0
    %1040 = vmatpush1.bf16.xpose.msra.mxu0 0
    %1041 = vmatprep.subr.bf16.mxu0 0
    %1042 = vmatpush1.bf16.xpose.msra.mxu0 0
    %1043 = vmatprep.subr.bf16.mxu0 0
    %1044 = vmatpush1.bf16.xpose.msra.mxu0 0
    %1045 = vmatprep.subr.bf16.mxu0 0
    %1046 = vmatpush1.bf16.xpose.msra.mxu0 0
    %1047 = vmatprep.mubr.bf16.mxu0 0
    %1048 = vmatmul.mubr.bf16.gmra.mrb[0].mxu0 %v1010
    %v1049 = vpop.f32.mrb[0].mxu0
    %v1050 = vadd.f32 0.0, %v1049
    %v1051 = vpop.f32.mrb[0].mxu0
    %v1052 = vpop.f32.mrb[0].mxu0
    %v1053 = vadd.f32 0.0, %v1052
    %v1054 = vpop.f32.mrb[0].mxu0
    %1055 = vdwg.mxu0
    %v1056 = vsel %vm571, %v999, -inf
    %1057 = vmax.xlane.f32.xlu0 %v1056
    %v1058 = vpop.xlane.xlu0 %1057
    %v1059 = vsel %vm571, %v1002, -inf
    %1060 = vmax.xlane.f32.xlu0 %v1059
    %v1061 = vpop.xlane.xlu0 %1060
    %v1062 = vsel %vm571, %v1050, -inf
    %1063 = vmax.xlane.f32.xlu0 %v1062
    %v1064 = vpop.xlane.xlu0 %1063
    %v1065 = vsel %vm571, %v1053, -inf
    %1066 = vmax.xlane.f32.xlu0 %v1065
    %v1067 = vpop.xlane.xlu0 %1066
    %v1068 = vsub.f32 %v999, %v1058
    %v1069 = vsub.f32 %v1002, %v1061
    %v1070 = vsub.f32 %v1050, %v1064
    %v1071 = vsub.f32 %v1053, %v1067
    %v1072 = vmul.f32 %v1068, 1.442695
    %v1073 = vpow.pop %v1072
    %v1074 = vmul.f32 %v1069, 1.442695
    %v1075 = vpow.pop %v1074
    %v1076 = vmul.f32 %v1070, 1.442695
    %v1077 = vpow.pop %v1076
    %v1078 = vmul.f32 %v1071, 1.442695
    %v1079 = vpow.pop %v1078
    %v1080 = vsel %vm571, %v1073, 0.0
    %1081 = vadd.xlane.f32.xlu0 %v1080
    %v1082 = vpop.xlane.xlu0 %1081
    %v1083 = vsel %vm571, %v1075, 0.0
    %1084 = vadd.xlane.f32.xlu0 %v1083
    %v1085 = vpop.xlane.xlu0 %1084
    %v1086 = vsel %vm571, %v1077, 0.0
    %1087 = vadd.xlane.f32.xlu0 %v1086
    %v1088 = vpop.xlane.xlu0 %1087
    %v1089 = vsel %vm571, %v1079, 0.0
    %1090 = vadd.xlane.f32.xlu0 %v1089
    %v1091 = vpop.xlane.xlu0 %1090
    %v1092 = vrcp.pop %v1082
    %v1093 = vrcp.pop %v1085
    %v1094 = vrcp.pop %v1088
    %v1095 = vrcp.pop %v1091
    %v1096 = vmul.f32 %v1073, %v1092
    %v1097 = vmul.f32 %v1075, %v1093
    %v1098 = vmul.f32 %v1077, %v1094
    %v1099 = vmul.f32 %v1079, %v1095
    %v1100 = vpack.c.bf16 %v1097, %v1096
    %v1101 = vpack.c.bf16 %v1099, %v1098
    %1102 = vrot.lane.b32.xlu0 %v474, 64
    %v1103 = vpop.permute.xlu0 %1102
    %v1106 = vsel %vm571, %v1100, 0
    %1108 = vmatprep.subr.bf16.mxu0 0
    %1109 = vmatpush1.bf16.msra.mxu0 %v1103
    %1110 = vmatprep.subr.bf16.mxu0 0
    %1111 = vmatpush1.bf16.msra.mxu0 0
    %1112 = vmatprep.subr.bf16.mxu0 0
    %1113 = vmatpush1.bf16.msra.mxu0 0
    %1114 = vmatprep.subr.bf16.mxu0 0
    %1115 = vmatpush1.bf16.msra.mxu0 0
    %1116 = vmatprep.subr.bf16.mxu0 0
    %1117 = vmatpush1.bf16.msra.mxu0 0
    %1118 = vmatprep.subr.bf16.mxu0 0
    %1119 = vmatpush1.bf16.msra.mxu0 0
    %1120 = vmatprep.subr.bf16.mxu0 0
    %1121 = vmatpush1.bf16.msra.mxu0 0
    %1122 = vmatprep.subr.bf16.mxu0 0
    %1123 = vmatpush1.bf16.msra.mxu0 0
    %1124 = vmatprep.subr.bf16.mxu0 0
    %1125 = vmatpush1.bf16.msra.mxu0 0
    %1126 = vmatprep.subr.bf16.mxu0 0
    %1127 = vmatpush1.bf16.msra.mxu0 0
    %1128 = vmatprep.subr.bf16.mxu0 0
    %1129 = vmatpush1.bf16.msra.mxu0 0
    %1130 = vmatprep.subr.bf16.mxu0 0
    %1131 = vmatpush1.bf16.msra.mxu0 0
    %1132 = vmatprep.subr.bf16.mxu0 0
    %1133 = vmatpush1.bf16.msra.mxu0 0
    %1134 = vmatprep.subr.bf16.mxu0 0
    %1135 = vmatpush1.bf16.msra.mxu0 0
    %1136 = vmatprep.subr.bf16.mxu0 0
    %1137 = vmatpush1.bf16.msra.mxu0 0
    %1138 = vmatprep.subr.bf16.mxu0 0
    %1139 = vmatpush1.bf16.msra.mxu0 0
    %1140 = vmatprep.mubr.bf16.mxu0 0
    %1141 = vmatmul.mubr.bf16.gmra.mrb[0].mxu0 %v1106
    %v1142 = vpop.f32.mrb[0].mxu0
    %v1143 = vadd.f32 0.0, %v1142
    %v1144 = vpop.f32.mrb[0].mxu0
    %v1145 = vpop.f32.mrb[0].mxu0
    %v1146 = vadd.f32 0.0, %v1145
    %v1147 = vpop.f32.mrb[0].mxu0
    %1148 = vdwg.mxu0
    %1149 = vrot.lane.b32.xlu0 %v475, 64
    %v1150 = vpop.permute.xlu0 %1149
    %v1153 = vsel %vm571, %v1101, 0
    %1155 = vmatprep.subr.bf16.mxu0 0
    %1156 = vmatpush1.bf16.msra.mxu0 %v1150
    %1157 = vmatprep.subr.bf16.mxu0 0
    %1158 = vmatpush1.bf16.msra.mxu0 0
    %1159 = vmatprep.subr.bf16.mxu0 0
    %1160 = vmatpush1.bf16.msra.mxu0 0
    %1161 = vmatprep.subr.bf16.mxu0 0
    %1162 = vmatpush1.bf16.msra.mxu0 0
    %1163 = vmatprep.subr.bf16.mxu0 0
    %1164 = vmatpush1.bf16.msra.mxu0 0
    %1165 = vmatprep.subr.bf16.mxu0 0
    %1166 = vmatpush1.bf16.msra.mxu0 0
    %1167 = vmatprep.subr.bf16.mxu0 0
    %1168 = vmatpush1.bf16.msra.mxu0 0
    %1169 = vmatprep.subr.bf16.mxu0 0
    %1170 = vmatpush1.bf16.msra.mxu0 0
    %1171 = vmatprep.subr.bf16.mxu0 0
    %1172 = vmatpush1.bf16.msra.mxu0 0
    %1173 = vmatprep.subr.bf16.mxu0 0
    %1174 = vmatpush1.bf16.msra.mxu0 0
    %1175 = vmatprep.subr.bf16.mxu0 0
    %1176 = vmatpush1.bf16.msra.mxu0 0
    %1177 = vmatprep.subr.bf16.mxu0 0
    %1178 = vmatpush1.bf16.msra.mxu0 0
    %1179 = vmatprep.subr.bf16.mxu0 0
    %1180 = vmatpush1.bf16.msra.mxu0 0
    %1181 = vmatprep.subr.bf16.mxu0 0
    %1182 = vmatpush1.bf16.msra.mxu0 0
    %1183 = vmatprep.subr.bf16.mxu0 0
    %1184 = vmatpush1.bf16.msra.mxu0 0
    %1185 = vmatprep.subr.bf16.mxu0 0
    %1186 = vmatpush1.bf16.msra.mxu0 0
    %1187 = vmatprep.mubr.bf16.mxu0 0
    %1188 = vmatmul.mubr.bf16.gmra.mrb[0].mxu0 %v1153
    %v1189 = vpop.f32.mrb[0].mxu0
    %v1190 = vadd.f32 0.0, %v1189
    %v1191 = vpop.f32.mrb[0].mxu0
    %v1192 = vpop.f32.mrb[0].mxu0
    %v1193 = vadd.f32 0.0, %v1192
    %v1194 = vpop.f32.mrb[0].mxu0
    %1195 = vdwg.mxu0
    %1196 = vrot.lane.b32.xlu0 %v470, 32
    %v1197 = vpop.permute.xlu0 %1196
    %1198 = vrot.lane.b32.xlu0 %v472, 32
    %v1199 = vpop.permute.xlu0 %1198
    %v1201 = vsel %vm476, %v1197, 0
    %v1204 = vsel %vm476, %v1199, 0
    %1206 = vmatprep.subr.bf16.mxu0 0
    %1207 = vmatpush1.bf16.xpose.msra.mxu0 %v1204
    %1208 = vmatprep.subr.bf16.mxu0 0
    %1209 = vmatpush1.bf16.xpose.msra.mxu0 0
    %1210 = vmatprep.subr.bf16.mxu0 0
    %1211 = vmatpush1.bf16.xpose.msra.mxu0 0
    %1212 = vmatprep.subr.bf16.mxu0 0
    %1213 = vmatpush1.bf16.xpose.msra.mxu0 0
    %1214 = vmatprep.subr.bf16.mxu0 0
    %1215 = vmatpush1.bf16.xpose.msra.mxu0 0
    %1216 = vmatprep.subr.bf16.mxu0 0
    %1217 = vmatpush1.bf16.xpose.msra.mxu0 0
    %1218 = vmatprep.subr.bf16.mxu0 0
    %1219 = vmatpush1.bf16.xpose.msra.mxu0 0
    %1220 = vmatprep.subr.bf16.mxu0 0
    %1221 = vmatpush1.bf16.xpose.msra.mxu0 0
    %1222 = vmatprep.subr.bf16.mxu0 0
    %1223 = vmatpush1.bf16.xpose.msra.mxu0 0
    %1224 = vmatprep.subr.bf16.mxu0 0
    %1225 = vmatpush1.bf16.xpose.msra.mxu0 0
    %1226 = vmatprep.subr.bf16.mxu0 0
    %1227 = vmatpush1.bf16.xpose.msra.mxu0 0
    %1228 = vmatprep.subr.bf16.mxu0 0
    %1229 = vmatpush1.bf16.xpose.msra.mxu0 0
    %1230 = vmatprep.subr.bf16.mxu0 0
    %1231 = vmatpush1.bf16.xpose.msra.mxu0 0
    %1232 = vmatprep.subr.bf16.mxu0 0
    %1233 = vmatpush1.bf16.xpose.msra.mxu0 0
    %1234 = vmatprep.subr.bf16.mxu0 0
    %1235 = vmatpush1.bf16.xpose.msra.mxu0 0
    %1236 = vmatprep.subr.bf16.mxu0 0
    %1237 = vmatpush1.bf16.xpose.msra.mxu0 0
    %1238 = vmatprep.mubr.bf16.mxu0 0
    %1239 = vmatmul.mubr.bf16.gmra.mrb[0].mxu0 %v1201
    %v1240 = vpop.f32.mrb[0].mxu0
    %v1241 = vadd.f32 0.0, %v1240
    %v1242 = vpop.f32.mrb[0].mxu0
    %v1243 = vpop.f32.mrb[0].mxu0
    %v1244 = vadd.f32 0.0, %v1243
    %v1245 = vpop.f32.mrb[0].mxu0
    %1246 = vdwg.mxu0
    %1247 = vrot.lane.b32.xlu0 %v471, 32
    %v1248 = vpop.permute.xlu0 %1247
    %1249 = vrot.lane.b32.xlu0 %v473, 32
    %v1250 = vpop.permute.xlu0 %1249
    %v1252 = vsel %vm476, %v1248, 0
    %v1255 = vsel %vm476, %v1250, 0
    %1257 = vmatprep.subr.bf16.mxu0 0
    %1258 = vmatpush1.bf16.xpose.msra.mxu0 %v1255
    %1259 = vmatprep.subr.bf16.mxu0 0
    %1260 = vmatpush1.bf16.xpose.msra.mxu0 0
    %1261 = vmatprep.subr.bf16.mxu0 0
    %1262 = vmatpush1.bf16.xpose.msra.mxu0 0
    %1263 = vmatprep.subr.bf16.mxu0 0
    %1264 = vmatpush1.bf16.xpose.msra.mxu0 0
    %1265 = vmatprep.subr.bf16.mxu0 0
    %1266 = vmatpush1.bf16.xpose.msra.mxu0 0
    %1267 = vmatprep.subr.bf16.mxu0 0
    %1268 = vmatpush1.bf16.xpose.msra.mxu0 0
    %1269 = vmatprep.subr.bf16.mxu0 0
    %1270 = vmatpush1.bf16.xpose.msra.mxu0 0
    %1271 = vmatprep.subr.bf16.mxu0 0
    %1272 = vmatpush1.bf16.xpose.msra.mxu0 0
    %1273 = vmatprep.subr.bf16.mxu0 0
    %1274 = vmatpush1.bf16.xpose.msra.mxu0 0
    %1275 = vmatprep.subr.bf16.mxu0 0
    %1276 = vmatpush1.bf16.xpose.msra.mxu0 0
    %1277 = vmatprep.subr.bf16.mxu0 0
    %1278 = vmatpush1.bf16.xpose.msra.mxu0 0
    %1279 = vmatprep.subr.bf16.mxu0 0
    %1280 = vmatpush1.bf16.xpose.msra.mxu0 0
    %1281 = vmatprep.subr.bf16.mxu0 0
    %1282 = vmatpush1.bf16.xpose.msra.mxu0 0
    %1283 = vmatprep.subr.bf16.mxu0 0
    %1284 = vmatpush1.bf16.xpose.msra.mxu0 0
    %1285 = vmatprep.subr.bf16.mxu0 0
    %1286 = vmatpush1.bf16.xpose.msra.mxu0 0
    %1287 = vmatprep.subr.bf16.mxu0 0
    %1288 = vmatpush1.bf16.xpose.msra.mxu0 0
    %1289 = vmatprep.mubr.bf16.mxu0 0
    %1290 = vmatmul.mubr.bf16.gmra.mrb[0].mxu0 %v1252
    %v1291 = vpop.f32.mrb[0].mxu0
    %v1292 = vadd.f32 0.0, %v1291
    %v1293 = vpop.f32.mrb[0].mxu0
    %v1294 = vpop.f32.mrb[0].mxu0
    %v1295 = vadd.f32 0.0, %v1294
    %v1296 = vpop.f32.mrb[0].mxu0
    %1297 = vdwg.mxu0
    %v1298 = vsel %vm571, %v1241, -inf
    %1299 = vmax.xlane.f32.xlu0 %v1298
    %v1300 = vpop.xlane.xlu0 %1299
    %v1301 = vsel %vm571, %v1244, -inf
    %1302 = vmax.xlane.f32.xlu0 %v1301
    %v1303 = vpop.xlane.xlu0 %1302
    %v1304 = vsel %vm571, %v1292, -inf
    %1305 = vmax.xlane.f32.xlu0 %v1304
    %v1306 = vpop.xlane.xlu0 %1305
    %v1307 = vsel %vm571, %v1295, -inf
    %1308 = vmax.xlane.f32.xlu0 %v1307
    %v1309 = vpop.xlane.xlu0 %1308
    %v1310 = vsub.f32 %v1241, %v1300
    %v1311 = vsub.f32 %v1244, %v1303
    %v1312 = vsub.f32 %v1292, %v1306
    %v1313 = vsub.f32 %v1295, %v1309
    %v1314 = vmul.f32 %v1310, 1.442695
    %v1315 = vpow.pop %v1314
    %v1316 = vmul.f32 %v1311, 1.442695
    %v1317 = vpow.pop %v1316
    %v1318 = vmul.f32 %v1312, 1.442695
    %v1319 = vpow.pop %v1318
    %v1320 = vmul.f32 %v1313, 1.442695
    %v1321 = vpow.pop %v1320
    %v1322 = vsel %vm571, %v1315, 0.0
    %1323 = vadd.xlane.f32.xlu0 %v1322
    %v1324 = vpop.xlane.xlu0 %1323
    %v1325 = vsel %vm571, %v1317, 0.0
    %1326 = vadd.xlane.f32.xlu0 %v1325
    %v1327 = vpop.xlane.xlu0 %1326
    %v1328 = vsel %vm571, %v1319, 0.0
    %1329 = vadd.xlane.f32.xlu0 %v1328
    %v1330 = vpop.xlane.xlu0 %1329
    %v1331 = vsel %vm571, %v1321, 0.0
    %1332 = vadd.xlane.f32.xlu0 %v1331
    %v1333 = vpop.xlane.xlu0 %1332
    %v1334 = vrcp.pop %v1324
    %v1335 = vrcp.pop %v1327
    %v1336 = vrcp.pop %v1330
    %v1337 = vrcp.pop %v1333
    %v1338 = vmul.f32 %v1315, %v1334
    %v1339 = vmul.f32 %v1317, %v1335
    %v1340 = vmul.f32 %v1319, %v1336
    %v1341 = vmul.f32 %v1321, %v1337
    %v1342 = vpack.c.bf16 %v1339, %v1338
    %v1343 = vpack.c.bf16 %v1341, %v1340
    %1344 = vrot.lane.b32.xlu0 %v474, 32
    %v1345 = vpop.permute.xlu0 %1344
    %v1348 = vsel %vm571, %v1342, 0
    %1350 = vmatprep.subr.bf16.mxu0 0
    %1351 = vmatpush1.bf16.msra.mxu0 %v1345
    %1352 = vmatprep.subr.bf16.mxu0 0
    %1353 = vmatpush1.bf16.msra.mxu0 0
    %1354 = vmatprep.subr.bf16.mxu0 0
    %1355 = vmatpush1.bf16.msra.mxu0 0
    %1356 = vmatprep.subr.bf16.mxu0 0
    %1357 = vmatpush1.bf16.msra.mxu0 0
    %1358 = vmatprep.subr.bf16.mxu0 0
    %1359 = vmatpush1.bf16.msra.mxu0 0
    %1360 = vmatprep.subr.bf16.mxu0 0
    %1361 = vmatpush1.bf16.msra.mxu0 0
    %1362 = vmatprep.subr.bf16.mxu0 0
    %1363 = vmatpush1.bf16.msra.mxu0 0
    %1364 = vmatprep.subr.bf16.mxu0 0
    %1365 = vmatpush1.bf16.msra.mxu0 0
    %1366 = vmatprep.subr.bf16.mxu0 0
    %1367 = vmatpush1.bf16.msra.mxu0 0
    %1368 = vmatprep.subr.bf16.mxu0 0
    %1369 = vmatpush1.bf16.msra.mxu0 0
    %1370 = vmatprep.subr.bf16.mxu0 0
    %1371 = vmatpush1.bf16.msra.mxu0 0
    %1372 = vmatprep.subr.bf16.mxu0 0
    %1373 = vmatpush1.bf16.msra.mxu0 0
    %1374 = vmatprep.subr.bf16.mxu0 0
    %1375 = vmatpush1.bf16.msra.mxu0 0
    %1376 = vmatprep.subr.bf16.mxu0 0
    %1377 = vmatpush1.bf16.msra.mxu0 0
    %1378 = vmatprep.subr.bf16.mxu0 0
    %1379 = vmatpush1.bf16.msra.mxu0 0
    %1380 = vmatprep.subr.bf16.mxu0 0
    %1381 = vmatpush1.bf16.msra.mxu0 0
    %1382 = vmatprep.mubr.bf16.mxu0 0
    %1383 = vmatmul.mubr.bf16.gmra.mrb[0].mxu0 %v1348
    %v1384 = vpop.f32.mrb[0].mxu0
    %v1385 = vadd.f32 0.0, %v1384
    %v1386 = vpop.f32.mrb[0].mxu0
    %v1387 = vpop.f32.mrb[0].mxu0
    %v1388 = vadd.f32 0.0, %v1387
    %v1389 = vpop.f32.mrb[0].mxu0
    %1390 = vdwg.mxu0
    %1391 = vrot.lane.b32.xlu0 %v475, 32
    %v1392 = vpop.permute.xlu0 %1391
    %v1395 = vsel %vm571, %v1343, 0
    %1397 = vmatprep.subr.bf16.mxu0 0
    %1398 = vmatpush1.bf16.msra.mxu0 %v1392
    %1399 = vmatprep.subr.bf16.mxu0 0
    %1400 = vmatpush1.bf16.msra.mxu0 0
    %1401 = vmatprep.subr.bf16.mxu0 0
    %1402 = vmatpush1.bf16.msra.mxu0 0
    %1403 = vmatprep.subr.bf16.mxu0 0
    %1404 = vmatpush1.bf16.msra.mxu0 0
    %1405 = vmatprep.subr.bf16.mxu0 0
    %1406 = vmatpush1.bf16.msra.mxu0 0
    %1407 = vmatprep.subr.bf16.mxu0 0
    %1408 = vmatpush1.bf16.msra.mxu0 0
    %1409 = vmatprep.subr.bf16.mxu0 0
    %1410 = vmatpush1.bf16.msra.mxu0 0
    %1411 = vmatprep.subr.bf16.mxu0 0
    %1412 = vmatpush1.bf16.msra.mxu0 0
    %1413 = vmatprep.subr.bf16.mxu0 0
    %1414 = vmatpush1.bf16.msra.mxu0 0
    %1415 = vmatprep.subr.bf16.mxu0 0
    %1416 = vmatpush1.bf16.msra.mxu0 0
    %1417 = vmatprep.subr.bf16.mxu0 0
    %1418 = vmatpush1.bf16.msra.mxu0 0
    %1419 = vmatprep.subr.bf16.mxu0 0
    %1420 = vmatpush1.bf16.msra.mxu0 0
    %1421 = vmatprep.subr.bf16.mxu0 0
    %1422 = vmatpush1.bf16.msra.mxu0 0
    %1423 = vmatprep.subr.bf16.mxu0 0
    %1424 = vmatpush1.bf16.msra.mxu0 0
    %1425 = vmatprep.subr.bf16.mxu0 0
    %1426 = vmatpush1.bf16.msra.mxu0 0
    %1427 = vmatprep.subr.bf16.mxu0 0
    %1428 = vmatpush1.bf16.msra.mxu0 0
    %1429 = vmatprep.mubr.bf16.mxu0 0
    %1430 = vmatmul.mubr.bf16.gmra.mrb[0].mxu0 %v1395
    %v1431 = vpop.f32.mrb[0].mxu0
    %v1432 = vadd.f32 0.0, %v1431
    %v1433 = vpop.f32.mrb[0].mxu0
    %v1434 = vpop.f32.mrb[0].mxu0
    %v1435 = vadd.f32 0.0, %v1434
    %v1436 = vpop.f32.mrb[0].mxu0
    %1437 = vdwg.mxu0
    %1442 = vrot.lane.b32.xlu0 %v900, 32
    %v1443 = vpop.permute.xlu0 %1442
    %1444 = vrot.lane.b32.xlu0 %v903, 32
    %v1445 = vpop.permute.xlu0 %1444
    %1446 = vrot.lane.b32.xlu0 %v948, 32
    %v1447 = vpop.permute.xlu0 %1446
    %1448 = vrot.lane.b32.xlu0 %v951, 32
    %v1449 = vpop.permute.xlu0 %1448
    %1458 = vrot.lane.b32.xlu0 %v1143, 64
    %v1459 = vpop.permute.xlu0 %1458
    %1460 = vrot.lane.b32.xlu0 %v1146, 64
    %v1461 = vpop.permute.xlu0 %1460
    %1462 = vrot.lane.b32.xlu0 %v1190, 64
    %v1463 = vpop.permute.xlu0 %1462
    %1464 = vrot.lane.b32.xlu0 %v1193, 64
    %v1465 = vpop.permute.xlu0 %1464
    %1474 = vrot.lane.b32.xlu0 %v1385, 96
    %v1475 = vpop.permute.xlu0 %1474
    %1476 = vrot.lane.b32.xlu0 %v1388, 96
    %v1477 = vpop.permute.xlu0 %1476
    %1478 = vrot.lane.b32.xlu0 %v1432, 96
    %v1479 = vpop.permute.xlu0 %1478
    %1480 = vrot.lane.b32.xlu0 %v1435, 96
    %v1481 = vpop.permute.xlu0 %1480
    %v1486 = vsel %vm476, %v656, %v1443
    %v1487 = vsel %vm476, %v659, %v1445
    %v1488 = vsel %vm476, %v700, %v1447
    %v1489 = vsel %vm476, %v703, %v1449
    %vm1490 = vcmask 523264
    %v1491 = vsel %vm1490, %v1486, %v1459
    %v1492 = vsel %vm1490, %v1487, %v1461
    %v1493 = vsel %vm1490, %v1488, %v1463
    %v1494 = vsel %vm1490, %v1489, %v1465
    %vm1495 = vcmask 785408
    %v1496 = vsel %vm1495, %v1491, %v1475
    %v1497 = vsel %vm1495, %v1492, %v1477
    %v1498 = vsel %vm1495, %v1493, %v1479
    %v1499 = vsel %vm1495, %v1494, %v1481
    %v1500 = vpack.c.bf16 %v1497, %v1496
    %v1501 = vpack.c.bf16 %v1499, %v1498
    %v1502 = vld [vmem:[#allocation7] sm:$0xf]
    %v1503 = vld [vmem:[#allocation7 + $0x4] sm:$0xf]
    %v1504 = vld [vmem:[#allocation7 + $0x8] sm:$0xf]
    %v1505 = vld [vmem:[#allocation7 + $0xc] sm:$0xf]
    %v1506 = vld [vmem:[#allocation7 + $0x10] sm:$0xf]
    %v1507 = vld [vmem:[#allocation7 + $0x14] sm:$0xf]
    %v1508 = vld [vmem:[#allocation7 + $0x18] sm:$0xf]
    %v1509 = vld [vmem:[#allocation7 + $0x1c] sm:$0xf]
    %v1510 = vld [vmem:[#allocation7 + $0x20] sm:$0xf]
    %v1511 = vld [vmem:[#allocation7 + $0x24] sm:$0xf]
    %v1512 = vld [vmem:[#allocation7 + $0x28] sm:$0xf]
    %v1513 = vld [vmem:[#allocation7 + $0x2c] sm:$0xf]
    %v1514 = vld [vmem:[#allocation7 + $0x30] sm:$0xf]
    %v1515 = vld [vmem:[#allocation7 + $0x34] sm:$0xf]
    %v1516 = vld [vmem:[#allocation7 + $0x38] sm:$0xf]
    %v1517 = vld [vmem:[#allocation7 + $0x3c] sm:$0xf]
    %v1518 = vld [vmem:[%s6] sm:$0x1]
    %v1520 = vlaneseq
    %v1521 = vshrl.u32 %v1520, 7
    %v1522 = vsub.s32 0, %v1521
    %v1523 = vrot.slane %v1518, %v1522
    %v1541 = vunpack.c.l.b16 %v1502
    %v1542 = vunpack.c.l.b16 %v1503
    %v1543 = vunpack.c.l.b16 %v1504
    %v1544 = vunpack.c.l.b16 %v1505
    %v1545 = vunpack.c.l.b16 %v1506
    %v1546 = vunpack.c.l.b16 %v1507
    %v1547 = vunpack.c.l.b16 %v1508
    %v1548 = vunpack.c.l.b16 %v1509
    %v1549 = vunpack.c.l.b16 %v1510
    %v1550 = vunpack.c.l.b16 %v1511
    %v1551 = vunpack.c.l.b16 %v1512
    %v1552 = vunpack.c.l.b16 %v1513
    %v1553 = vunpack.c.l.b16 %v1514
    %v1554 = vunpack.c.l.b16 %v1515
    %v1555 = vunpack.c.l.b16 %v1516
    %v1556 = vunpack.c.l.b16 %v1517
    %v1557 = vpack.c.b16 %v1542, %v1541
    %v1558 = vpack.c.b16 %v1544, %v1543
    %v1559 = vpack.c.b16 %v1546, %v1545
    %v1560 = vpack.c.b16 %v1548, %v1547
    %v1561 = vpack.c.b16 %v1550, %v1549
    %v1562 = vpack.c.b16 %v1552, %v1551
    %v1563 = vpack.c.b16 %v1554, %v1553
    %v1564 = vpack.c.b16 %v1556, %v1555
    %1573 = vmatprep.subr.bf16.mxu0 0
    %1574 = vmatpush1.bf16.msra.mxu0 %v1557
    %1575 = vmatprep.subr.bf16.mxu0 0
    %1576 = vmatpush1.bf16.msra.mxu0 %v1558
    %1577 = vmatprep.subr.bf16.mxu0 0
    %1578 = vmatpush1.bf16.msra.mxu0 %v1559
    %1579 = vmatprep.subr.bf16.mxu0 0
    %1580 = vmatpush1.bf16.msra.mxu0 %v1560
    %1581 = vmatprep.subr.bf16.mxu0 0
    %1582 = vmatpush1.bf16.msra.mxu0 %v1561
    %1583 = vmatprep.subr.bf16.mxu0 0
    %1584 = vmatpush1.bf16.msra.mxu0 %v1562
    %1585 = vmatprep.subr.bf16.mxu0 0
    %1586 = vmatpush1.bf16.msra.mxu0 %v1563
    %1587 = vmatprep.subr.bf16.mxu0 0
    %1588 = vmatpush1.bf16.msra.mxu0 %v1564
    %1589 = vmatprep.subr.bf16.mxu0 0
    %1590 = vmatpush1.bf16.msra.mxu0 0
    %1591 = vmatprep.subr.bf16.mxu0 0
    %1592 = vmatpush1.bf16.msra.mxu0 0
    %1593 = vmatprep.subr.bf16.mxu0 0
    %1594 = vmatpush1.bf16.msra.mxu0 0
    %1595 = vmatprep.subr.bf16.mxu0 0
    %1596 = vmatpush1.bf16.msra.mxu0 0
    %1597 = vmatprep.subr.bf16.mxu0 0
    %1598 = vmatpush1.bf16.msra.mxu0 0
    %1599 = vmatprep.subr.bf16.mxu0 0
    %1600 = vmatpush1.bf16.msra.mxu0 0
    %1601 = vmatprep.subr.bf16.mxu0 0
    %1602 = vmatpush1.bf16.msra.mxu0 0
    %1603 = vmatprep.subr.bf16.mxu0 0
    %1604 = vmatpush1.bf16.msra.mxu0 0
    %1605 = vmatprep.mubr.bf16.mxu0 0
    %1606 = vmatmul.mubr.bf16.gmra.mrb[0].mxu0 %v1500
    %v1607 = vpop.f32.mrb[0].mxu0
    %v1608 = vadd.f32 %v1523, %v1607
    %v1609 = vpop.f32.mrb[0].mxu0
    %v1610 = vpop.f32.mrb[0].mxu0
    %v1611 = vadd.f32 %v1523, %v1610
    %v1612 = vpop.f32.mrb[0].mxu0
    %1613 = vmatprep.mubr.bf16.mxu0 0
    %1614 = vmatmul.mubr.bf16.gmra.mrb[0].mxu0 %v1501
    %v1615 = vpop.f32.mrb[0].mxu0
    %v1616 = vadd.f32 %v1523, %v1615
    %v1617 = vpop.f32.mrb[0].mxu0
    %v1618 = vpop.f32.mrb[0].mxu0
    %v1619 = vadd.f32 %v1523, %v1618
    %v1620 = vpop.f32.mrb[0].mxu0
    %1621 = vdwg.mxu0
    %v1622 = vadd.f32 %v114, %v1608
    %v1623 = vadd.f32 %v115, %v1611
    %v1624 = vadd.f32 %v116, %v1616
    %v1625 = vadd.f32 %v117, %v1619
    %v1626 = vld [vmem:[%s7] sm:$0x1]
    %v1627 = vld [vmem:[%s8] sm:$0x1]
    %1628 = vadd.xlane.f32.xlu0 %v1622
    %v1629 = vpop.xlane.xlu0 %1628
    %1630 = vadd.xlane.f32.xlu0 %v1623
    %v1631 = vpop.xlane.xlu0 %1630
    %1632 = vadd.xlane.f32.xlu0 %v1624
    %v1633 = vpop.xlane.xlu0 %1632
    %1634 = vadd.xlane.f32.xlu0 %v1625
    %v1635 = vpop.xlane.xlu0 %1634
    %v1636 = vmul.f32 %v1629, %v128
    %v1637 = vmul.f32 %v1631, %v128
    %v1638 = vmul.f32 %v1633, %v128
    %v1639 = vmul.f32 %v1635, %v128
    %v1640 = vsub.f32 %v1622, %v1636
    %v1641 = vsub.f32 %v1623, %v1637
    %v1642 = vsub.f32 %v1624, %v1638
    %v1643 = vsub.f32 %v1625, %v1639
    %v1644 = vmul.f32 %v1640, %v1640
    %v1645 = vmul.f32 %v1641, %v1641
    %v1646 = vmul.f32 %v1642, %v1642
    %v1647 = vmul.f32 %v1643, %v1643
    %1648 = vadd.xlane.f32.xlu0 %v1644
    %v1649 = vpop.xlane.xlu0 %1648
    %1650 = vadd.xlane.f32.xlu0 %v1645
    %v1651 = vpop.xlane.xlu0 %1650
    %1652 = vadd.xlane.f32.xlu0 %v1646
    %v1653 = vpop.xlane.xlu0 %1652
    %1654 = vadd.xlane.f32.xlu0 %v1647
    %v1655 = vpop.xlane.xlu0 %1654
    %v1656 = vmul.f32 %v1649, %v128
    %v1657 = vmul.f32 %v1651, %v128
    %v1658 = vmul.f32 %v1653, %v128
    %v1659 = vmul.f32 %v1655, %v128
    %v1660 = vadd.f32 %v1656, 1e-06
    %v1661 = vadd.f32 %v1657, 1e-06
    %v1662 = vadd.f32 %v1658, 1e-06
    %v1663 = vadd.f32 %v1659, 1e-06
    %v1664 = vrsqrt.pop %v1660
    %v1665 = vrsqrt.pop %v1661
    %v1666 = vrsqrt.pop %v1662
    %v1667 = vrsqrt.pop %v1663
    %v1668 = vmul.f32 %v1640, %v1664
    %v1669 = vmul.f32 %v1641, %v1665
    %v1670 = vmul.f32 %v1642, %v1666
    %v1671 = vmul.f32 %v1643, %v1667
    %v1673 = vlaneseq
    %v1674 = vshrl.u32 %v1673, 7
    %v1675 = vsub.s32 0, %v1674
    %v1676 = vrot.slane %v1626, %v1675
    %v1678 = vmul.f32 %v1668, %v1676
    %v1679 = vmul.f32 %v1669, %v1676
    %v1680 = vmul.f32 %v1670, %v1676
    %v1681 = vmul.f32 %v1671, %v1676
    %v1683 = vlaneseq
    %v1684 = vshrl.u32 %v1683, 7
    %v1685 = vsub.s32 0, %v1684
    %v1686 = vrot.slane %v1627, %v1685
    %v1688 = vadd.f32 %v1678, %v1686
    %v1689 = vadd.f32 %v1679, %v1686
    %v1690 = vadd.f32 %v1680, %v1686
    %v1691 = vadd.f32 %v1681, %v1686
    %v1692 = vpack.c.bf16 %v1689, %v1688
    %v1693 = vpack.c.bf16 %v1691, %v1690
    %v1694 = vld [vmem:[#allocation8] sm:$0xff]
    %v1695 = vld [vmem:[#allocation8 + $0x8] sm:$0xff]
    %v1696 = vld [vmem:[#allocation8 + $0x10] sm:$0xff]
    %v1697 = vld [vmem:[#allocation8 + $0x18] sm:$0xff]
    %v1698 = vld [vmem:[#allocation8 + $0x20] sm:$0xff]
    %v1699 = vld [vmem:[#allocation8 + $0x28] sm:$0xff]
    %v1700 = vld [vmem:[#allocation8 + $0x30] sm:$0xff]
    %v1701 = vld [vmem:[#allocation8 + $0x38] sm:$0xff]
    %v1702 = vld [vmem:[#allocation8 + $0x40] sm:$0xff]
    %v1703 = vld [vmem:[#allocation8 + $0x48] sm:$0xff]
    %v1704 = vld [vmem:[#allocation8 + $0x50] sm:$0xff]
    %v1705 = vld [vmem:[#allocation8 + $0x58] sm:$0xff]
    %v1706 = vld [vmem:[#allocation8 + $0x60] sm:$0xff]
    %v1707 = vld [vmem:[#allocation8 + $0x68] sm:$0xff]
    %v1708 = vld [vmem:[#allocation8 + $0x70] sm:$0xff]
    %v1709 = vld [vmem:[#allocation8 + $0x78] sm:$0xff]
    %v1710 = vld [vmem:[%s10] sm:$0x3]
    %v1712 = vlaneseq
    %v1713 = vshrl.u32 %v1712, 7
    %v1714 = vsub.s32 0, %v1713
    %v1715 = vrot.slane %v1710, %v1714
    %v1716 = vlaneseq
    %v1717 = vshrl.u32 %v1716, 7
    %v1718 = vsub.s32 1, %v1717
    %v1719 = vrot.slane %v1710, %v1718
    %v1738 = vunpack.c.l.b16 %v1694
    %v1739 = vunpack.c.h.b16 %v1694
    %v1740 = vunpack.c.l.b16 %v1695
    %v1741 = vunpack.c.h.b16 %v1695
    %v1742 = vunpack.c.l.b16 %v1696
    %v1743 = vunpack.c.h.b16 %v1696
    %v1744 = vunpack.c.l.b16 %v1697
    %v1745 = vunpack.c.h.b16 %v1697
    %v1746 = vunpack.c.l.b16 %v1698
    %v1747 = vunpack.c.h.b16 %v1698
    %v1748 = vunpack.c.l.b16 %v1699
    %v1749 = vunpack.c.h.b16 %v1699
    %v1750 = vunpack.c.l.b16 %v1700
    %v1751 = vunpack.c.h.b16 %v1700
    %v1752 = vunpack.c.l.b16 %v1701
    %v1753 = vunpack.c.h.b16 %v1701
    %v1754 = vunpack.c.l.b16 %v1702
    %v1755 = vunpack.c.h.b16 %v1702
    %v1756 = vunpack.c.l.b16 %v1703
    %v1757 = vunpack.c.h.b16 %v1703
    %v1758 = vunpack.c.l.b16 %v1704
    %v1759 = vunpack.c.h.b16 %v1704
    %v1760 = vunpack.c.l.b16 %v1705
    %v1761 = vunpack.c.h.b16 %v1705
    %v1762 = vunpack.c.l.b16 %v1706
    %v1763 = vunpack.c.h.b16 %v1706
    %v1764 = vunpack.c.l.b16 %v1707
    %v1765 = vunpack.c.h.b16 %v1707
    %v1766 = vunpack.c.l.b16 %v1708
    %v1767 = vunpack.c.h.b16 %v1708
    %v1768 = vunpack.c.l.b16 %v1709
    %v1769 = vunpack.c.h.b16 %v1709
    %v1770 = vpack.c.b16 %v1740, %v1738
    %v1771 = vpack.c.b16 %v1741, %v1739
    %v1772 = vpack.c.b16 %v1744, %v1742
    %v1773 = vpack.c.b16 %v1745, %v1743
    %v1774 = vpack.c.b16 %v1748, %v1746
    %v1775 = vpack.c.b16 %v1749, %v1747
    %v1776 = vpack.c.b16 %v1752, %v1750
    %v1777 = vpack.c.b16 %v1753, %v1751
    %v1778 = vpack.c.b16 %v1756, %v1754
    %v1779 = vpack.c.b16 %v1757, %v1755
    %v1780 = vpack.c.b16 %v1760, %v1758
    %v1781 = vpack.c.b16 %v1761, %v1759
    %v1782 = vpack.c.b16 %v1764, %v1762
    %v1783 = vpack.c.b16 %v1765, %v1763
    %v1784 = vpack.c.b16 %v1768, %v1766
    %v1785 = vpack.c.b16 %v1769, %v1767
    %1802 = vmatprep.subr.bf16.mxu0 %v1771
    %1803 = vmatpush1.bf16.msra.mxu0 %v1770
    %1804 = vmatprep.subr.bf16.mxu0 %v1773
    %1805 = vmatpush1.bf16.msra.mxu0 %v1772
    %1806 = vmatprep.subr.bf16.mxu0 %v1775
    %1807 = vmatpush1.bf16.msra.mxu0 %v1774
    %1808 = vmatprep.subr.bf16.mxu0 %v1777
    %1809 = vmatpush1.bf16.msra.mxu0 %v1776
    %1810 = vmatprep.subr.bf16.mxu0 %v1779
    %1811 = vmatpush1.bf16.msra.mxu0 %v1778
    %1812 = vmatprep.subr.bf16.mxu0 %v1781
    %1813 = vmatpush1.bf16.msra.mxu0 %v1780
    %1814 = vmatprep.subr.bf16.mxu0 %v1783
    %1815 = vmatpush1.bf16.msra.mxu0 %v1782
    %1816 = vmatprep.subr.bf16.mxu0 %v1785
    %1817 = vmatpush1.bf16.msra.mxu0 %v1784
    %1818 = vmatprep.subr.bf16.mxu0 0
    %1819 = vmatpush1.bf16.msra.mxu0 0
    %1820 = vmatprep.subr.bf16.mxu0 0
    %1821 = vmatpush1.bf16.msra.mxu0 0
    %1822 = vmatprep.subr.bf16.mxu0 0
    %1823 = vmatpush1.bf16.msra.mxu0 0
    %1824 = vmatprep.subr.bf16.mxu0 0
    %1825 = vmatpush1.bf16.msra.mxu0 0
    %1826 = vmatprep.subr.bf16.mxu0 0
    %1827 = vmatpush1.bf16.msra.mxu0 0
    %1828 = vmatprep.subr.bf16.mxu0 0
    %1829 = vmatpush1.bf16.msra.mxu0 0
    %1830 = vmatprep.subr.bf16.mxu0 0
    %1831 = vmatpush1.bf16.msra.mxu0 0
    %1832 = vmatprep.subr.bf16.mxu0 0
    %1833 = vmatpush1.bf16.msra.mxu0 0
    %1834 = vmatprep.mubr.bf16.mxu0 0
    %1835 = vmatmul.mubr.bf16.gmra.mrb[0].mxu0 %v1692
    %v1836 = vpop.f32.mrb[0].mxu0
    %v1837 = vadd.f32 %v1715, %v1836
    %v1838 = vpop.f32.mrb[0].mxu0
    %v1839 = vadd.f32 %v1719, %v1838
    %v1840 = vpop.f32.mrb[0].mxu0
    %v1841 = vadd.f32 %v1715, %v1840
    %v1842 = vpop.f32.mrb[0].mxu0
    %v1843 = vadd.f32 %v1719, %v1842
    %1844 = vmatprep.mubr.bf16.mxu0 0
    %1845 = vmatmul.mubr.bf16.gmra.mrb[0].mxu0 %v1693
    %v1846 = vpop.f32.mrb[0].mxu0
    %v1847 = vadd.f32 %v1715, %v1846
    %v1848 = vpop.f32.mrb[0].mxu0
    %v1849 = vadd.f32 %v1719, %v1848
    %v1850 = vpop.f32.mrb[0].mxu0
    %v1851 = vadd.f32 %v1715, %v1850
    %v1852 = vpop.f32.mrb[0].mxu0
    %v1853 = vadd.f32 %v1719, %v1852
    %1854 = vdwg.mxu0
    %v1855 = vmul.f32 %v1837, 0.5
    %v1856 = vmul.f32 %v1839, 0.5
    %v1857 = vmul.f32 %v1841, 0.5
    %v1858 = vmul.f32 %v1843, 0.5
    %v1859 = vmul.f32 %v1847, 0.5
    %v1860 = vmul.f32 %v1849, 0.5
    %v1861 = vmul.f32 %v1851, 0.5
    %v1862 = vmul.f32 %v1853, 0.5
    %v1863 = vmul.f32 %v1837, 0.044715
    %v1864 = vmul.f32 %v1839, 0.044715
    %v1865 = vmul.f32 %v1841, 0.044715
    %v1866 = vmul.f32 %v1843, 0.044715
    %v1867 = vmul.f32 %v1847, 0.044715
    %v1868 = vmul.f32 %v1849, 0.044715
    %v1869 = vmul.f32 %v1851, 0.044715
    %v1870 = vmul.f32 %v1853, 0.044715
    %v1871 = vmul.f32 %v1863, %v1837
    %v1872 = vmul.f32 %v1864, %v1839
    %v1873 = vmul.f32 %v1865, %v1841
    %v1874 = vmul.f32 %v1866, %v1843
    %v1875 = vmul.f32 %v1867, %v1847
    %v1876 = vmul.f32 %v1868, %v1849
    %v1877 = vmul.f32 %v1869, %v1851
    %v1878 = vmul.f32 %v1870, %v1853
    %v1879 = vmul.f32 %v1871, %v1837
    %v1880 = vmul.f32 %v1872, %v1839
    %v1881 = vmul.f32 %v1873, %v1841
    %v1882 = vmul.f32 %v1874, %v1843
    %v1883 = vmul.f32 %v1875, %v1847
    %v1884 = vmul.f32 %v1876, %v1849
    %v1885 = vmul.f32 %v1877, %v1851
    %v1886 = vmul.f32 %v1878, %v1853
    %v1887 = vadd.f32 %v1837, %v1879
    %v1888 = vadd.f32 %v1839, %v1880
    %v1889 = vadd.f32 %v1841, %v1881
    %v1890 = vadd.f32 %v1843, %v1882
    %v1891 = vadd.f32 %v1847, %v1883
    %v1892 = vadd.f32 %v1849, %v1884
    %v1893 = vadd.f32 %v1851, %v1885
    %v1894 = vadd.f32 %v1853, %v1886
    %v1895 = vmul.f32 %v1887, 0.7978846
    %v1896 = vmul.f32 %v1888, 0.7978846
    %v1897 = vmul.f32 %v1889, 0.7978846
    %v1898 = vmul.f32 %v1890, 0.7978846
    %v1899 = vmul.f32 %v1891, 0.7978846
    %v1900 = vmul.f32 %v1892, 0.7978846
    %v1901 = vmul.f32 %v1893, 0.7978846
    %v1902 = vmul.f32 %v1894, 0.7978846
    %v1903 = vtanh.pop %v1895
    %v1904 = vtanh.pop %v1896
    %v1905 = vtanh.pop %v1897
    %v1906 = vtanh.pop %v1898
    %v1907 = vtanh.pop %v1899
    %v1908 = vtanh.pop %v1900
    %v1909 = vtanh.pop %v1901
    %v1910 = vtanh.pop %v1902
    %v1911 = vadd.f32 %v1903, 1.0
    %v1912 = vadd.f32 %v1904, 1.0
    %v1913 = vadd.f32 %v1905, 1.0
    %v1914 = vadd.f32 %v1906, 1.0
    %v1915 = vadd.f32 %v1907, 1.0
    %v1916 = vadd.f32 %v1908, 1.0
    %v1917 = vadd.f32 %v1909, 1.0
    %v1918 = vadd.f32 %v1910, 1.0
    %v1919 = vmul.f32 %v1855, %v1911
    %v1920 = vmul.f32 %v1856, %v1912
    %v1921 = vmul.f32 %v1857, %v1913
    %v1922 = vmul.f32 %v1858, %v1914
    %v1923 = vmul.f32 %v1859, %v1915
    %v1924 = vmul.f32 %v1860, %v1916
    %v1925 = vmul.f32 %v1861, %v1917
    %v1926 = vmul.f32 %v1862, %v1918
    %v1927 = vpack.c.bf16 %v1921, %v1919
    %v1928 = vpack.c.bf16 %v1922, %v1920
    %v1929 = vpack.c.bf16 %v1925, %v1923
    %v1930 = vpack.c.bf16 %v1926, %v1924
    %v1931 = vld [vmem:[#allocation10] sm:$0xf]
    %v1932 = vld [vmem:[#allocation10 + $0x4] sm:$0xf]
    %v1933 = vld [vmem:[#allocation10 + $0x8] sm:$0xf]
    %v1934 = vld [vmem:[#allocation10 + $0xc] sm:$0xf]
    %v1935 = vld [vmem:[#allocation10 + $0x10] sm:$0xf]
    %v1936 = vld [vmem:[#allocation10 + $0x14] sm:$0xf]
    %v1937 = vld [vmem:[#allocation10 + $0x18] sm:$0xf]
    %v1938 = vld [vmem:[#allocation10 + $0x1c] sm:$0xf]
    %v1939 = vld [vmem:[#allocation10 + $0x20] sm:$0xf]
    %v1940 = vld [vmem:[#allocation10 + $0x24] sm:$0xf]
    %v1941 = vld [vmem:[#allocation10 + $0x28] sm:$0xf]
    %v1942 = vld [vmem:[#allocation10 + $0x2c] sm:$0xf]
    %v1943 = vld [vmem:[#allocation10 + $0x30] sm:$0xf]
    %v1944 = vld [vmem:[#allocation10 + $0x34] sm:$0xf]
    %v1945 = vld [vmem:[#allocation10 + $0x38] sm:$0xf]
    %v1946 = vld [vmem:[#allocation10 + $0x3c] sm:$0xf]
    %v1947 = vld [vmem:[#allocation10 + $0x40] sm:$0xf]
    %v1948 = vld [vmem:[#allocation10 + $0x44] sm:$0xf]
    %v1949 = vld [vmem:[#allocation10 + $0x48] sm:$0xf]
    %v1950 = vld [vmem:[#allocation10 + $0x4c] sm:$0xf]
    %v1951 = vld [vmem:[#allocation10 + $0x50] sm:$0xf]
    %v1952 = vld [vmem:[#allocation10 + $0x54] sm:$0xf]
    %v1953 = vld [vmem:[#allocation10 + $0x58] sm:$0xf]
    %v1954 = vld [vmem:[#allocation10 + $0x5c] sm:$0xf]
    %v1955 = vld [vmem:[#allocation10 + $0x60] sm:$0xf]
    %v1956 = vld [vmem:[#allocation10 + $0x64] sm:$0xf]
    %v1957 = vld [vmem:[#allocation10 + $0x68] sm:$0xf]
    %v1958 = vld [vmem:[#allocation10 + $0x6c] sm:$0xf]
    %v1959 = vld [vmem:[#allocation10 + $0x70] sm:$0xf]
    %v1960 = vld [vmem:[#allocation10 + $0x74] sm:$0xf]
    %v1961 = vld [vmem:[#allocation10 + $0x78] sm:$0xf]
    %v1962 = vld [vmem:[#allocation10 + $0x7c] sm:$0xf]
    %v1963 = vld [vmem:[%s12] sm:$0x1]
    %v1965 = vlaneseq
    %v1966 = vshrl.u32 %v1965, 7
    %v1967 = vsub.s32 0, %v1966
    %v1968 = vrot.slane %v1963, %v1967
    %v2002 = vunpack.c.l.b16 %v1931
    %v2003 = vunpack.c.l.b16 %v1932
    %v2004 = vunpack.c.l.b16 %v1933
    %v2005 = vunpack.c.l.b16 %v1934
    %v2006 = vunpack.c.l.b16 %v1935
    %v2007 = vunpack.c.l.b16 %v1936
    %v2008 = vunpack.c.l.b16 %v1937
    %v2009 = vunpack.c.l.b16 %v1938
    %v2010 = vunpack.c.l.b16 %v1939
    %v2011 = vunpack.c.l.b16 %v1940
    %v2012 = vunpack.c.l.b16 %v1941
    %v2013 = vunpack.c.l.b16 %v1942
    %v2014 = vunpack.c.l.b16 %v1943
    %v2015 = vunpack.c.l.b16 %v1944
    %v2016 = vunpack.c.l.b16 %v1945
    %v2017 = vunpack.c.l.b16 %v1946
    %v2018 = vunpack.c.l.b16 %v1947
    %v2019 = vunpack.c.l.b16 %v1948
    %v2020 = vunpack.c.l.b16 %v1949
    %v2021 = vunpack.c.l.b16 %v1950
    %v2022 = vunpack.c.l.b16 %v1951
    %v2023 = vunpack.c.l.b16 %v1952
    %v2024 = vunpack.c.l.b16 %v1953
    %v2025 = vunpack.c.l.b16 %v1954
    %v2026 = vunpack.c.l.b16 %v1955
    %v2027 = vunpack.c.l.b16 %v1956
    %v2028 = vunpack.c.l.b16 %v1957
    %v2029 = vunpack.c.l.b16 %v1958
    %v2030 = vunpack.c.l.b16 %v1959
    %v2031 = vunpack.c.l.b16 %v1960
    %v2032 = vunpack.c.l.b16 %v1961
    %v2033 = vunpack.c.l.b16 %v1962
    %v2034 = vpack.c.b16 %v2003, %v2002
    %v2035 = vpack.c.b16 %v2005, %v2004
    %v2036 = vpack.c.b16 %v2007, %v2006
    %v2037 = vpack.c.b16 %v2009, %v2008
    %v2038 = vpack.c.b16 %v2011, %v2010
    %v2039 = vpack.c.b16 %v2013, %v2012
    %v2040 = vpack.c.b16 %v2015, %v2014
    %v2041 = vpack.c.b16 %v2017, %v2016
    %v2042 = vpack.c.b16 %v2019, %v2018
    %v2043 = vpack.c.b16 %v2021, %v2020
    %v2044 = vpack.c.b16 %v2023, %v2022
    %v2045 = vpack.c.b16 %v2025, %v2024
    %v2046 = vpack.c.b16 %v2027, %v2026
    %v2047 = vpack.c.b16 %v2029, %v2028
    %v2048 = vpack.c.b16 %v2031, %v2030
    %v2049 = vpack.c.b16 %v2033, %v2032
    %2066 = vmatprep.subr.bf16.mxu0 0
    %2067 = vmatpush1.bf16.msra.mxu0 %v2034
    %2068 = vmatprep.subr.bf16.mxu0 0
    %2069 = vmatpush1.bf16.msra.mxu0 %v2035
    %2070 = vmatprep.subr.bf16.mxu0 0
    %2071 = vmatpush1.bf16.msra.mxu0 %v2036
    %2072 = vmatprep.subr.bf16.mxu0 0
    %2073 = vmatpush1.bf16.msra.mxu0 %v2037
    %2074 = vmatprep.subr.bf16.mxu0 0
    %2075 = vmatpush1.bf16.msra.mxu0 %v2038
    %2076 = vmatprep.subr.bf16.mxu0 0
    %2077 = vmatpush1.bf16.msra.mxu0 %v2039
    %2078 = vmatprep.subr.bf16.mxu0 0
    %2079 = vmatpush1.bf16.msra.mxu0 %v2040
    %2080 = vmatprep.subr.bf16.mxu0 0
    %2081 = vmatpush1.bf16.msra.mxu0 %v2041
    %2082 = vmatprep.subr.bf16.mxu0 0
    %2083 = vmatpush1.bf16.msra.mxu0 %v2042
    %2084 = vmatprep.subr.bf16.mxu0 0
    %2085 = vmatpush1.bf16.msra.mxu0 %v2043
    %2086 = vmatprep.subr.bf16.mxu0 0
    %2087 = vmatpush1.bf16.msra.mxu0 %v2044
    %2088 = vmatprep.subr.bf16.mxu0 0
    %2089 = vmatpush1.bf16.msra.mxu0 %v2045
    %2090 = vmatprep.subr.bf16.mxu0 0
    %2091 = vmatpush1.bf16.msra.mxu0 %v2046
    %2092 = vmatprep.subr.bf16.mxu0 0
    %2093 = vmatpush1.bf16.msra.mxu0 %v2047
    %2094 = vmatprep.subr.bf16.mxu0 0
    %2095 = vmatpush1.bf16.msra.mxu0 %v2048
    %2096 = vmatprep.subr.bf16.mxu0 0
    %2097 = vmatpush1.bf16.msra.mxu0 %v2049
    %2098 = vmatprep.mubr.bf16.mxu0 %v1928
    %2099 = vmatmul.mubr.bf16.gmra.mrb[0].mxu0 %v1927
    %v2100 = vpop.f32.mrb[0].mxu0
    %v2101 = vadd.f32 %v1968, %v2100
    %v2102 = vpop.f32.mrb[0].mxu0
    %v2103 = vpop.f32.mrb[0].mxu0
    %v2104 = vadd.f32 %v1968, %v2103
    %v2105 = vpop.f32.mrb[0].mxu0
    %2106 = vmatprep.mubr.bf16.mxu0 %v1930
    %2107 = vmatmul.mubr.bf16.gmra.mrb[0].mxu0 %v1929
    %v2108 = vpop.f32.mrb[0].mxu0
    %v2109 = vadd.f32 %v1968, %v2108
    %v2110 = vpop.f32.mrb[0].mxu0
    %v2111 = vpop.f32.mrb[0].mxu0
    %v2112 = vadd.f32 %v1968, %v2111
    %v2113 = vpop.f32.mrb[0].mxu0
    %2114 = vdwg.mxu0
    %v2115 = vadd.f32 %v1622, %v2101
    %v2116 = vadd.f32 %v1623, %v2104
    %v2117 = vadd.f32 %v1624, %v2109
    %v2118 = vadd.f32 %v1625, %v2112
    %2119 = vst [vmem:[#allocation11] sm:$0xff] %v2115
    %2120 = vst [vmem:[#allocation11 + $0x8] sm:$0xff] %v2116
    %2121 = vst [vmem:[#allocation11 + $0x10] sm:$0xff] %v2117
    %2122 = vst [vmem:[#allocation11 + $0x18] sm:$0xff] %v2118
    // Predicated region
    $region74: #{tpu_custom_call.1} parent=1 // pred_check
      _
    $region75: #{tpu_custom_call.1} parent=1 // pred_check_branch
      %2124 = sbr.rel (0) target = $region77
    $region76: #{tpu_custom_call.1} parent=1 // pred_region
      %s2126 = ssub.s32 512, 512
      %2127 = vsyncadd [#allocation4], %s2126
      %s2128 = sshll.u32 [#allocation11], 4
      %s2129 = int_to_ptr.vmem [resolvable:$true] %s2128
      %2134 = dma.vmem_to_hbm [thread:$0]  %s2129, 512, %s13, [#allocation4], 128, 128, 8
    $region77: #{tpu_custom_call.1} parent=1 // pred_fallthru
      _
    // Predicated region
    $region78: #{tpu_custom_call.1} parent=1 // pred_check
      _
    $region79: #{tpu_custom_call.1} parent=1 // pred_check_branch
      %2136 = sbr.rel (0) target = $region81
    $region80: #{tpu_custom_call.1} parent=1 // pred_region
      %2137 = dma.done [#allocation4], 512
    $region81: #{tpu_custom_call.1} parent=1 // pred_fallthru
      _
    %2138 = vsyncpa [#allocation3], 1
    %2139 = vsyncpa [#allocation6], 1
    %2140 = vsyncpa [#allocation9], 1
    %2141 = vsyncpa [#allocation4], 1

</llo_original>
